<compile_context>
chip_gen: v5e
topology: v5e:2x2
jax: 0.10.0
libtpu: 0.0.40
codegen_flags: <defaults>
</compile_context>

<pallas_src>
import functools

import jax
import jax.numpy as jnp
from jax import lax
from jax.experimental import pallas as pl
from jax.experimental.pallas import tpu as pltpu


def _convblock_kernel(x_ref, w1_ref, gb1_ref, w2_ref, gb2_ref, o_ref,
                      xe_ref, he_ref, *, H, W, K, neg_slope, eps):
    """Fused ConvLayer x2 for one batch item (channels-major / lane-dense).

    x_ref  : (1, Cin, H*W)        input, channels-major flat
    w1_ref : (K*K, Cmid, Cin)     conv1 per-tap (O, I) matrices, bf16
    gb1_ref: (Cmid, 2)            col0=gamma1, col1=beta1 (f32)
    w2_ref : (K*K, Cout, Cmid)    conv2 per-tap (O, I) matrices, bf16
    gb2_ref: (Cout, 2)            col0=gamma2, col1=beta2 (f32)
    o_ref  : (1, Cout, H*W)       output, channels-major flat (lane-dense)
    xe_ref : VMEM (Cin,  H*W+2e)  halo-extended flat layer-1 input scratch
    he_ref : VMEM (Cmid, H*W+2e)  halo-extended flat layer-1 output scratch
    """
    pad = K // 2
    HW = H * W
    ext = pad * W + pad                    # halo lanes on each side
    inv_hw = jnp.float32(1.0 / HW)
    Cin = x_ref.shape[1]
    Cmid = w1_ref.shape[1]
    Cout = w2_ref.shape[1]
    cdt = xe_ref.dtype                     # MXU operand dtype (bf16)

    # Per-kx column-validity masks: output column w receives the (ky, kx) tap
    # only if 0 <= w + kx - pad < W (zero padding outside the row).  Only the
    # off-center kx need a mask; for K=3 that is one column per side.
    col = lax.broadcasted_iota(jnp.int32, (1, HW), 1) % W
    col_masks = []
    for kx in range(K):
        lo, hi = pad - kx, W + pad - kx
        if lo <= 0 and hi >= W:
            col_masks.append(None)         # tap never leaves the row
        else:
            col_masks.append(((col >= lo) & (col < hi)).astype(cdt))

    def conv(src_ref, w_ref, c_out):
        # K*K accumulated (c_out, c_in) x (c_in, HW) matmuls over statically
        # shifted lane views of the halo-extended flat activation buffer.
        # Row over/under-runs land in the zeroed halo; column over-runs are
        # cancelled by the kx mask (applied to the cheaper c_in-row operand).
        acc = jnp.zeros((c_out, HW), jnp.float32)
        for ky in range(K):
            for kx in range(K):
                sl = src_ref[:, ky * W + kx: ky * W + kx + HW]
                if col_masks[kx] is not None:
                    sl = sl * col_masks[kx]
                acc = acc + jnp.dot(w_ref[ky * K + kx], sl,
                                    preferred_element_type=jnp.float32)
        return acc

    def inorm_lrelu(y, gb_ref):
        # InstanceNorm (biased variance, clamped) + affine + LeakyReLU in f32.
        mean = jnp.sum(y, axis=1, keepdims=True) * inv_hw
        var = jnp.sum(y * y, axis=1, keepdims=True) * inv_hw - mean * mean
        var = jnp.maximum(var, 0.0)
        scale = gb_ref[:, 0:1] * lax.rsqrt(var + eps)
        shift = gb_ref[:, 1:2] - mean * scale
        y = y * scale + shift
        return jnp.maximum(y, neg_slope * y)     # LeakyReLU, 0 <= slope <= 1

    # Halo-only zeroing each grid step (interior is fully overwritten; keeps
    # the kernel correct when the grid is split across megacore cores).
    xe_ref[:, 0:ext] = jnp.zeros((Cin, ext), cdt)
    xe_ref[:, ext + HW: ext + HW + ext] = jnp.zeros((Cin, ext), cdt)
    he_ref[:, 0:ext] = jnp.zeros((Cmid, ext), cdt)
    he_ref[:, ext + HW: ext + HW + ext] = jnp.zeros((Cmid, ext), cdt)

    # -------- layer 1: conv3x3 -> InstanceNorm -> LeakyReLU --------
    xe_ref[:, ext: ext + HW] = x_ref[0].astype(cdt)
    y1 = inorm_lrelu(conv(xe_ref, w1_ref, Cmid), gb1_ref)

    # -------- layer 2: conv3x3 -> InstanceNorm -> LeakyReLU --------
    he_ref[:, ext: ext + HW] = y1.astype(cdt)
    y2 = inorm_lrelu(conv(he_ref, w2_ref, Cout), gb2_ref)

    o_ref[0] = y2.astype(o_ref.dtype)


def conv_block_pallas(x_nchw, params, *, negative_slope=0.01, eps=1e-5,
                      mxu_dtype=jnp.bfloat16):
    """ConvBlock: ConvLayer(Cin->Cout, stride=1) -> ConvLayer(Cout->Cout, stride=1)."""
    N, Cin, H, W = x_nchw.shape
    w1 = params["conv1"]["w"]                      # (Cmid, Cin, K, K)  OIHW
    w2 = params["conv2"]["w"]                      # (Cout, Cmid, K, K)
    Cmid, _, K, _ = w1.shape
    Cout = w2.shape[0]
    pad = K // 2                                   # get_padding(K, 1) for odd K
    HW = H * W
    ext = pad * W + pad

    # NCHW -> (N, C, H*W): channels-major flat, a free reshape (no transpose),
    # and a lane-dense HBM->VMEM DMA.
    x_flat = x_nchw.reshape(N, Cin, HW)

    # OIHW -> (K*K, O, I) per-tap matrices in bf16 for the MXU.  Conv biases
    # are intentionally NOT fed to the kernel: a per-channel constant added
    # before InstanceNorm cancels exactly in the mean subtraction.
    w1_taps = jnp.transpose(w1, (2, 3, 0, 1)).reshape(K * K, Cmid, Cin).astype(mxu_dtype)
    w2_taps = jnp.transpose(w2, (2, 3, 0, 1)).reshape(K * K, Cout, Cmid).astype(mxu_dtype)
    gb1 = jnp.stack([params["conv1"]["gamma"], params["conv1"]["beta"]],
                    axis=1).astype(jnp.float32)    # (Cmid, 2)
    gb2 = jnp.stack([params["conv2"]["gamma"], params["conv2"]["beta"]],
                    axis=1).astype(jnp.float32)    # (Cout, 2)

    kernel = functools.partial(_convblock_kernel, H=H, W=W, K=K,
                               neg_slope=negative_slope, eps=eps)

    # Explicit VMEM budget (matters for v7x's 64 MiB once row-band tiling is
    # added; tiny at these shapes): double-buffered in/out blocks + halo'd
    # scratches + weights, plus generous layout/pipelining headroom.
    io_item = jnp.dtype(x_nchw.dtype).itemsize
    mxu_item = jnp.dtype(mxu_dtype).itemsize
    vmem_budget = int(2 * (Cin + Cout) * HW * io_item
                      + (Cin + Cmid) * (HW + 2 * ext) * mxu_item
                      + K * K * (Cmid * Cin + Cout * Cmid) * mxu_item
                      + (8 << 20))

    out = pl.pallas_call(
        kernel,
        out_shape=jax.ShapeDtypeStruct((N, Cout, HW), x_nchw.dtype),
        grid=(N,),
        in_specs=[
            pl.BlockSpec((1, Cin, HW), lambda n: (n, 0, 0)),
            pl.BlockSpec((K * K, Cmid, Cin), lambda n: (0, 0, 0)),
            pl.BlockSpec((Cmid, 2), lambda n: (0, 0)),
            pl.BlockSpec((K * K, Cout, Cmid), lambda n: (0, 0, 0)),
            pl.BlockSpec((Cout, 2), lambda n: (0, 0)),
        ],
        out_specs=pl.BlockSpec((1, Cout, HW), lambda n: (n, 0, 0)),
        scratch_shapes=[
            pltpu.VMEM((Cin, HW + 2 * ext), mxu_dtype),   # halo'd layer-1 input
            pltpu.VMEM((Cmid, HW + 2 * ext), mxu_dtype),  # halo'd layer-1 output
        ],
        compiler_params=pltpu.CompilerParams(
            dimension_semantics=("parallel",),
            vmem_limit_bytes=vmem_budget),
    )(x_flat, w1_taps, gb1, w2_taps, gb2)

    # (N, Cout, H*W) -> (N, Cout, H, W): contiguous reshape, already NCHW.
    return out.reshape(N, Cout, H, W)


# ----------------------------- pure-JAX reference -----------------------------
def _ref_layer(x, w, b, gamma, beta, *, negative_slope=0.01, eps=1e-5):
    y = lax.conv_general_dilated(
        x, w, window_strides=(1, 1), padding=((1, 1), (1, 1)),
        dimension_numbers=("NCHW", "OIHW", "NCHW"),
        precision=lax.Precision.HIGHEST)
    y = y + b[None, :, None, None]
    mean = jnp.mean(y, axis=(2, 3), keepdims=True)
    var = jnp.mean((y - mean) ** 2, axis=(2, 3), keepdims=True)
    y = (y - mean) * lax.rsqrt(var + eps)
    y = y * gamma[None, :, None, None] + beta[None, :, None, None]
    return jnp.where(y >= 0, y, negative_slope * y)


def conv_block_ref(x, params, *, negative_slope=0.01):
    y = _ref_layer(x, params["conv1"]["w"], params["conv1"]["b"],
                   params["conv1"]["gamma"], params["conv1"]["beta"],
                   negative_slope=negative_slope)
    y = _ref_layer(y, params["conv2"]["w"], params["conv2"]["b"],
                   params["conv2"]["gamma"], params["conv2"]["beta"],
                   negative_slope=negative_slope)
    return y


# ----------------------------------- main -------------------------------------
if __name__ == "__main__":
    key = jax.random.PRNGKey(0)
    N, Cin, Cout, H, W, K = 2, 4, 8, 16, 16, 3

    k_x, k_w1, k_b1, k_w2, k_b2 = jax.random.split(key, 5)
    x = jax.random.normal(k_x, (N, Cin, H, W), dtype=jnp.float32)

    # PyTorch InstanceNorm affine init: gamma=1, beta=0.
    params = {
        "conv1": {
            "w": jax.random.normal(k_w1, (Cout, Cin, K, K), jnp.float32) * 0.1,
            "b": jax.random.normal(k_b1, (Cout,), jnp.float32) * 0.1,
            "gamma": jnp.ones((Cout,), jnp.float32),
            "beta": jnp.zeros((Cout,), jnp.float32),
        },
        "conv2": {
            "w": jax.random.normal(k_w2, (Cout, Cout, K, K), jnp.float32) * 0.1,
            "b": jax.random.normal(k_b2, (Cout,), jnp.float32) * 0.1,
            "gamma": jnp.ones((Cout,), jnp.float32),
            "beta": jnp.zeros((Cout,), jnp.float32),
        },
    }

    out = jax.block_until_ready(conv_block_pallas(x, params))
    ref = jax.block_until_ready(conv_block_ref(x, params))

    assert out.shape == (N, Cout, H, W), out.shape
    # Tolerance sized for bf16 MXU operands (InstanceNorm renormalizes, so the
    # error stays a few bf16 ulp on O(1) activations across the two layers).
    max_err = float(jnp.max(jnp.abs(out - ref)))
    assert jnp.allclose(out, ref, atol=5e-2, rtol=5e-2), max_err

    print("KERNEL_OK")
</pallas_src>

<mosaic_0001>
module attributes {stable_mosaic.version = 11 : i64} {
  func.func @_convblock_kernel(%arg0: i32, %arg1: memref<1x4x256xf32, #tpu.memory_space<vmem>>, %arg2: memref<9x8x4xbf16, #tpu.memory_space<vmem>>, %arg3: memref<8x2xf32, #tpu.memory_space<vmem>>, %arg4: memref<9x8x8xbf16, #tpu.memory_space<vmem>>, %arg5: memref<8x2xf32, #tpu.memory_space<vmem>>, %arg6: memref<1x8x256xf32, #tpu.memory_space<vmem>>, %arg7: memref<4x290xbf16, #tpu.memory_space<vmem>>, %arg8: memref<8x290xbf16, #tpu.memory_space<vmem>>) attributes {dimension_semantics = [#tpu.dimension_semantics<parallel>], iteration_bounds = array<i64: 2>, scalar_prefetch = 0 : i64, scratch_operands = 2 : i64, tpu.core_type = #tpu.core_type<tc>, window_params = [{transform_indices = @transform_0, window_bounds = array<i64: 1, 4, 256>}, {pipeline_mode = #tpu.pipeline_mode<synchronous>, transform_indices = @transform_1, window_bounds = array<i64: 9, 8, 4>}, {pipeline_mode = #tpu.pipeline_mode<synchronous>, transform_indices = @transform_2, window_bounds = array<i64: 8, 2>}, {pipeline_mode = #tpu.pipeline_mode<synchronous>, transform_indices = @transform_3, window_bounds = array<i64: 9, 8, 8>}, {pipeline_mode = #tpu.pipeline_mode<synchronous>, transform_indices = @transform_4, window_bounds = array<i64: 8, 2>}, {transform_indices = @transform_5, window_bounds = array<i64: 1, 8, 256>}]} {
    %0 = tpu.iota {dimensions = array<i32: 1>} : vector<1x256xi32>
    %c16_i32 = arith.constant 16 : i32
    %c0_i32 = arith.constant 0 : i32
    %1 = arith.cmpi eq, %c16_i32, %c0_i32 : i32
    %c1_i32 = arith.constant 1 : i32
    %2 = arith.select %1, %c1_i32, %c16_i32 : i32
    %3 = vector.broadcast %2 : i32 to vector<1x256xi32>
    %4 = arith.remsi %0, %3 : vector<1x256xi32>
    %c0_i32_0 = arith.constant 0 : i32
    %5 = vector.broadcast %c0_i32_0 : i32 to vector<1x256xi32>
    %6 = arith.cmpi ne, %4, %5 : vector<1x256xi32>
    %c0_i32_1 = arith.constant 0 : i32
    %7 = vector.broadcast %c0_i32_1 : i32 to vector<1x256xi32>
    %8 = arith.cmpi slt, %4, %7 : vector<1x256xi32>
    %c0_i32_2 = arith.constant 0 : i32
    %9 = arith.cmpi slt, %2, %c0_i32_2 : i32
    %10 = vector.broadcast %9 : i1 to vector<1x256xi1>
    %11 = vector.broadcast %10 : vector<1x256xi1> to vector<1x256xi1>
    %12 = arith.xori %8, %11 : vector<1x256xi1>
    %13 = arith.andi %12, %6 : vector<1x256xi1>
    %14 = vector.broadcast %2 : i32 to vector<1x256xi32>
    %15 = arith.addi %4, %14 : vector<1x256xi32>
    %16 = arith.select %13, %15, %4 : vector<1x256xi1>, vector<1x256xi32>
    %c1_i32_3 = arith.constant 1 : i32
    %17 = vector.broadcast %c1_i32_3 : i32 to vector<1x256xi32>
    %18 = arith.cmpi sge, %16, %17 : vector<1x256xi32>
    %c17_i32 = arith.constant 17 : i32
    %19 = vector.broadcast %c17_i32 : i32 to vector<1x256xi32>
    %20 = arith.cmpi slt, %16, %19 : vector<1x256xi32>
    %21 = arith.andi %18, %20 : vector<1x256xi1>
    %22 = arith.extui %21 : vector<1x256xi1> to vector<1x256xi32>
    %23 = arith.sitofp %22 : vector<1x256xi32> to vector<1x256xf32>
    %24 = arith.truncf %23 : vector<1x256xf32> to vector<1x256xbf16>
    %c-1_i32 = arith.constant -1 : i32
    %25 = vector.broadcast %c-1_i32 : i32 to vector<1x256xi32>
    %26 = arith.cmpi sge, %16, %25 : vector<1x256xi32>
    %c15_i32 = arith.constant 15 : i32
    %27 = vector.broadcast %c15_i32 : i32 to vector<1x256xi32>
    %28 = arith.cmpi slt, %16, %27 : vector<1x256xi32>
    %29 = arith.andi %26, %28 : vector<1x256xi1>
    %30 = arith.extui %29 : vector<1x256xi1> to vector<1x256xi32>
    %31 = arith.sitofp %30 : vector<1x256xi32> to vector<1x256xf32>
    %32 = arith.truncf %31 : vector<1x256xf32> to vector<1x256xbf16>
    %cst = arith.constant 0.000000e+00 : bf16
    %33 = vector.broadcast %cst : bf16 to vector<4x17xbf16>
    %c0 = arith.constant 0 : index
    %c0_4 = arith.constant 0 : index
    %34 = vector.load %arg7[%c0, %c0_4] : memref<4x290xbf16, #tpu.memory_space<vmem>>, vector<4x17xbf16>
    tpu.vector_store %arg7[%c0, %c0_4], %33 {strides = array<i32>} : memref<4x290xbf16, #tpu.memory_space<vmem>>, vector<4x17xbf16>,
    %cst_5 = arith.constant 0.000000e+00 : bf16
    %35 = vector.broadcast %cst_5 : bf16 to vector<4x17xbf16>
    %c0_6 = arith.constant 0 : index
    %c273 = arith.constant 273 : index
    %36 = vector.load %arg7[%c0_6, %c273] : memref<4x290xbf16, #tpu.memory_space<vmem>>, vector<4x17xbf16>
    tpu.vector_store %arg7[%c0_6, %c273], %35 {strides = array<i32>} : memref<4x290xbf16, #tpu.memory_space<vmem>>, vector<4x17xbf16>,
    %cst_7 = arith.constant 0.000000e+00 : bf16
    %37 = vector.broadcast %cst_7 : bf16 to vector<8x17xbf16>
    %c0_8 = arith.constant 0 : index
    %c0_9 = arith.constant 0 : index
    %38 = vector.load %arg8[%c0_8, %c0_9] : memref<8x290xbf16, #tpu.memory_space<vmem>>, vector<8x17xbf16>
    tpu.vector_store %arg8[%c0_8, %c0_9], %37 {strides = array<i32>} : memref<8x290xbf16, #tpu.memory_space<vmem>>, vector<8x17xbf16>,
    %cst_10 = arith.constant 0.000000e+00 : bf16
    %39 = vector.broadcast %cst_10 : bf16 to vector<8x17xbf16>
    %c0_11 = arith.constant 0 : index
    %c273_12 = arith.constant 273 : index
    %40 = vector.load %arg8[%c0_11, %c273_12] : memref<8x290xbf16, #tpu.memory_space<vmem>>, vector<8x17xbf16>
    tpu.vector_store %arg8[%c0_11, %c273_12], %39 {strides = array<i32>} : memref<8x290xbf16, #tpu.memory_space<vmem>>, vector<8x17xbf16>,
    %c0_13 = arith.constant 0 : index
    %c0_14 = arith.constant 0 : index
    %c0_15 = arith.constant 0 : index
    %41 = vector.load %arg1[%c0_13, %c0_14, %c0_15] : memref<1x4x256xf32, #tpu.memory_space<vmem>>, vector<1x4x256xf32>
    %42 = vector.shape_cast %41 : vector<1x4x256xf32> to vector<4x256xf32>
    %43 = arith.truncf %42 : vector<4x256xf32> to vector<4x256xbf16>
    %c0_16 = arith.constant 0 : index
    %c17 = arith.constant 17 : index
    %44 = vector.load %arg7[%c0_16, %c17] : memref<4x290xbf16, #tpu.memory_space<vmem>>, vector<4x256xbf16>
    tpu.vector_store %arg7[%c0_16, %c17], %43 {strides = array<i32>} : memref<4x290xbf16, #tpu.memory_space<vmem>>, vector<4x256xbf16>,
    %cst_17 = arith.constant 0.000000e+00 : f32
    %45 = vector.broadcast %cst_17 : f32 to vector<8x256xf32>
    %c0_18 = arith.constant 0 : index
    %c0_19 = arith.constant 0 : index
    %46 = vector.load %arg7[%c0_18, %c0_19] : memref<4x290xbf16, #tpu.memory_space<vmem>>, vector<4x256xbf16>
    %47 = vector.broadcast %24 : vector<1x256xbf16> to vector<4x256xbf16>
    %48 = arith.mulf %46, %47 : vector<4x256xbf16>
    %c0_20 = arith.constant 0 : index
    %c0_21 = arith.constant 0 : index
    %c0_22 = arith.constant 0 : index
    %49 = vector.load %arg2[%c0_20, %c0_21, %c0_22] : memref<9x8x4xbf16, #tpu.memory_space<vmem>>, vector<1x8x4xbf16>
    %50 = vector.shape_cast %49 : vector<1x8x4xbf16> to vector<8x4xbf16>
    %cst_23 = arith.constant dense<0.000000e+00> : vector<8x256xf32>
    %51 = tpu.matmul %50, %48, %cst_23 {dimension_numbers = #tpu.dot_dimension_numbers<[1], [0], [0], [1], [0, 0, 1, 1], [], []>} : vector<8x4xbf16>, vector<4x256xbf16>, vector<8x256xf32> -> vector<8x256xf32>
    %52 = arith.addf %45, %51 : vector<8x256xf32>
    %c0_24 = arith.constant 0 : index
    %c1 = arith.constant 1 : index
    %53 = vector.load %arg7[%c0_24, %c1] : memref<4x290xbf16, #tpu.memory_space<vmem>>, vector<4x256xbf16>
    %c1_25 = arith.constant 1 : index
    %c0_26 = arith.constant 0 : index
    %c0_27 = arith.constant 0 : index
    %54 = vector.load %arg2[%c1_25, %c0_26, %c0_27] : memref<9x8x4xbf16, #tpu.memory_space<vmem>>, vector<1x8x4xbf16>
    %55 = vector.shape_cast %54 : vector<1x8x4xbf16> to vector<8x4xbf16>
    %cst_28 = arith.constant dense<0.000000e+00> : vector<8x256xf32>
    %56 = tpu.matmul %55, %53, %cst_28 {dimension_numbers = #tpu.dot_dimension_numbers<[1], [0], [0], [1], [0, 0, 1, 1], [], []>} : vector<8x4xbf16>, vector<4x256xbf16>, vector<8x256xf32> -> vector<8x256xf32>
    %57 = arith.addf %52, %56 : vector<8x256xf32>
    %c0_29 = arith.constant 0 : index
    %c2 = arith.constant 2 : index
    %58 = vector.load %arg7[%c0_29, %c2] : memref<4x290xbf16, #tpu.memory_space<vmem>>, vector<4x256xbf16>
    %59 = vector.broadcast %32 : vector<1x256xbf16> to vector<4x256xbf16>
    %60 = arith.mulf %58, %59 : vector<4x256xbf16>
    %c2_30 = arith.constant 2 : index
    %c0_31 = arith.constant 0 : index
    %c0_32 = arith.constant 0 : index
    %61 = vector.load %arg2[%c2_30, %c0_31, %c0_32] : memref<9x8x4xbf16, #tpu.memory_space<vmem>>, vector<1x8x4xbf16>
    %62 = vector.shape_cast %61 : vector<1x8x4xbf16> to vector<8x4xbf16>
    %cst_33 = arith.constant dense<0.000000e+00> : vector<8x256xf32>
    %63 = tpu.matmul %62, %60, %cst_33 {dimension_numbers = #tpu.dot_dimension_numbers<[1], [0], [0], [1], [0, 0, 1, 1], [], []>} : vector<8x4xbf16>, vector<4x256xbf16>, vector<8x256xf32> -> vector<8x256xf32>
    %64 = arith.addf %57, %63 : vector<8x256xf32>
    %c0_34 = arith.constant 0 : index
    %c16 = arith.constant 16 : index
    %65 = vector.load %arg7[%c0_34, %c16] : memref<4x290xbf16, #tpu.memory_space<vmem>>, vector<4x256xbf16>
    %66 = vector.broadcast %24 : vector<1x256xbf16> to vector<4x256xbf16>
    %67 = arith.mulf %65, %66 : vector<4x256xbf16>
    %c3 = arith.constant 3 : index
    %c0_35 = arith.constant 0 : index
    %c0_36 = arith.constant 0 : index
    %68 = vector.load %arg2[%c3, %c0_35, %c0_36] : memref<9x8x4xbf16, #tpu.memory_space<vmem>>, vector<1x8x4xbf16>
    %69 = vector.shape_cast %68 : vector<1x8x4xbf16> to vector<8x4xbf16>
    %cst_37 = arith.constant dense<0.000000e+00> : vector<8x256xf32>
    %70 = tpu.matmul %69, %67, %cst_37 {dimension_numbers = #tpu.dot_dimension_numbers<[1], [0], [0], [1], [0, 0, 1, 1], [], []>} : vector<8x4xbf16>, vector<4x256xbf16>, vector<8x256xf32> -> vector<8x256xf32>
    %71 = arith.addf %64, %70 : vector<8x256xf32>
    %c0_38 = arith.constant 0 : index
    %c17_39 = arith.constant 17 : index
    %72 = vector.load %arg7[%c0_38, %c17_39] : memref<4x290xbf16, #tpu.memory_space<vmem>>, vector<4x256xbf16>
    %c4 = arith.constant 4 : index
    %c0_40 = arith.constant 0 : index
    %c0_41 = arith.constant 0 : index
    %73 = vector.load %arg2[%c4, %c0_40, %c0_41] : memref<9x8x4xbf16, #tpu.memory_space<vmem>>, vector<1x8x4xbf16>
    %74 = vector.shape_cast %73 : vector<1x8x4xbf16> to vector<8x4xbf16>
    %cst_42 = arith.constant dense<0.000000e+00> : vector<8x256xf32>
    %75 = tpu.matmul %74, %72, %cst_42 {dimension_numbers = #tpu.dot_dimension_numbers<[1], [0], [0], [1], [0, 0, 1, 1], [], []>} : vector<8x4xbf16>, vector<4x256xbf16>, vector<8x256xf32> -> vector<8x256xf32>
    %76 = arith.addf %71, %75 : vector<8x256xf32>
    %c0_43 = arith.constant 0 : index
    %c18 = arith.constant 18 : index
    %77 = vector.load %arg7[%c0_43, %c18] : memref<4x290xbf16, #tpu.memory_space<vmem>>, vector<4x256xbf16>
    %78 = vector.broadcast %32 : vector<1x256xbf16> to vector<4x256xbf16>
    %79 = arith.mulf %77, %78 : vector<4x256xbf16>
    %c5 = arith.constant 5 : index
    %c0_44 = arith.constant 0 : index
    %c0_45 = arith.constant 0 : index
    %80 = vector.load %arg2[%c5, %c0_44, %c0_45] : memref<9x8x4xbf16, #tpu.memory_space<vmem>>, vector<1x8x4xbf16>
    %81 = vector.shape_cast %80 : vector<1x8x4xbf16> to vector<8x4xbf16>
    %cst_46 = arith.constant dense<0.000000e+00> : vector<8x256xf32>
    %82 = tpu.matmul %81, %79, %cst_46 {dimension_numbers = #tpu.dot_dimension_numbers<[1], [0], [0], [1], [0, 0, 1, 1], [], []>} : vector<8x4xbf16>, vector<4x256xbf16>, vector<8x256xf32> -> vector<8x256xf32>
    %83 = arith.addf %76, %82 : vector<8x256xf32>
    %c0_47 = arith.constant 0 : index
    %c32 = arith.constant 32 : index
    %84 = vector.load %arg7[%c0_47, %c32] : memref<4x290xbf16, #tpu.memory_space<vmem>>, vector<4x256xbf16>
    %85 = vector.broadcast %24 : vector<1x256xbf16> to vector<4x256xbf16>
    %86 = arith.mulf %84, %85 : vector<4x256xbf16>
    %c6 = arith.constant 6 : index
    %c0_48 = arith.constant 0 : index
    %c0_49 = arith.constant 0 : index
    %87 = vector.load %arg2[%c6, %c0_48, %c0_49] : memref<9x8x4xbf16, #tpu.memory_space<vmem>>, vector<1x8x4xbf16>
    %88 = vector.shape_cast %87 : vector<1x8x4xbf16> to vector<8x4xbf16>
    %cst_50 = arith.constant dense<0.000000e+00> : vector<8x256xf32>
    %89 = tpu.matmul %88, %86, %cst_50 {dimension_numbers = #tpu.dot_dimension_numbers<[1], [0], [0], [1], [0, 0, 1, 1], [], []>} : vector<8x4xbf16>, vector<4x256xbf16>, vector<8x256xf32> -> vector<8x256xf32>
    %90 = arith.addf %83, %89 : vector<8x256xf32>
    %c0_51 = arith.constant 0 : index
    %c33 = arith.constant 33 : index
    %91 = vector.load %arg7[%c0_51, %c33] : memref<4x290xbf16, #tpu.memory_space<vmem>>, vector<4x256xbf16>
    %c7 = arith.constant 7 : index
    %c0_52 = arith.constant 0 : index
    %c0_53 = arith.constant 0 : index
    %92 = vector.load %arg2[%c7, %c0_52, %c0_53] : memref<9x8x4xbf16, #tpu.memory_space<vmem>>, vector<1x8x4xbf16>
    %93 = vector.shape_cast %92 : vector<1x8x4xbf16> to vector<8x4xbf16>
    %cst_54 = arith.constant dense<0.000000e+00> : vector<8x256xf32>
    %94 = tpu.matmul %93, %91, %cst_54 {dimension_numbers = #tpu.dot_dimension_numbers<[1], [0], [0], [1], [0, 0, 1, 1], [], []>} : vector<8x4xbf16>, vector<4x256xbf16>, vector<8x256xf32> -> vector<8x256xf32>
    %95 = arith.addf %90, %94 : vector<8x256xf32>
    %c0_55 = arith.constant 0 : index
    %c34 = arith.constant 34 : index
    %96 = vector.load %arg7[%c0_55, %c34] : memref<4x290xbf16, #tpu.memory_space<vmem>>, vector<4x256xbf16>
    %97 = vector.broadcast %32 : vector<1x256xbf16> to vector<4x256xbf16>
    %98 = arith.mulf %96, %97 : vector<4x256xbf16>
    %c8 = arith.constant 8 : index
    %c0_56 = arith.constant 0 : index
    %c0_57 = arith.constant 0 : index
    %99 = vector.load %arg2[%c8, %c0_56, %c0_57] : memref<9x8x4xbf16, #tpu.memory_space<vmem>>, vector<1x8x4xbf16>
    %100 = vector.shape_cast %99 : vector<1x8x4xbf16> to vector<8x4xbf16>
    %cst_58 = arith.constant dense<0.000000e+00> : vector<8x256xf32>
    %101 = tpu.matmul %100, %98, %cst_58 {dimension_numbers = #tpu.dot_dimension_numbers<[1], [0], [0], [1], [0, 0, 1, 1], [], []>} : vector<8x4xbf16>, vector<4x256xbf16>, vector<8x256xf32> -> vector<8x256xf32>
    %102 = arith.addf %95, %101 : vector<8x256xf32>
    %cst_59 = arith.constant dense<0.000000e+00> : vector<8xf32>
    %103 = vector.multi_reduction <add>, %102, %cst_59 [1] : vector<8x256xf32> to vector<8xf32>
    %104 = vector.shape_cast %103 : vector<8xf32> to vector<8x1xf32>
    %cst_60 = arith.constant 3.906250e-03 : f32
    %105 = vector.broadcast %cst_60 : f32 to vector<8x1xf32>
    %106 = arith.mulf %104, %105 : vector<8x1xf32>
    %107 = arith.mulf %102, %102 : vector<8x256xf32>
    %cst_61 = arith.constant dense<0.000000e+00> : vector<8xf32>
    %108 = vector.multi_reduction <add>, %107, %cst_61 [1] : vector<8x256xf32> to vector<8xf32>
    %109 = vector.shape_cast %108 : vector<8xf32> to vector<8x1xf32>
    %cst_62 = arith.constant 3.906250e-03 : f32
    %110 = vector.broadcast %cst_62 : f32 to vector<8x1xf32>
    %111 = arith.mulf %109, %110 : vector<8x1xf32>
    %112 = arith.mulf %106, %106 : vector<8x1xf32>
    %113 = arith.subf %111, %112 : vector<8x1xf32>
    %cst_63 = arith.constant 0.000000e+00 : f32
    %114 = vector.broadcast %cst_63 : f32 to vector<8x1xf32>
    %115 = arith.maximumf %113, %114 : vector<8x1xf32>
    %c0_64 = arith.constant 0 : index
    %c0_65 = arith.constant 0 : index
    %116 = vector.load %arg3[%c0_64, %c0_65] : memref<8x2xf32, #tpu.memory_space<vmem>>, vector<8x1xf32>
    %cst_66 = arith.constant 9.99999974E-6 : f32
    %117 = vector.broadcast %cst_66 : f32 to vector<8x1xf32>
    %118 = arith.addf %115, %117 : vector<8x1xf32>
    %119 = math.rsqrt %118 : vector<8x1xf32>
    %120 = arith.mulf %116, %119 : vector<8x1xf32>
    %c0_67 = arith.constant 0 : index
    %c1_68 = arith.constant 1 : index
    %121 = vector.load %arg3[%c0_67, %c1_68] : memref<8x2xf32, #tpu.memory_space<vmem>>, vector<8x1xf32>
    %122 = arith.mulf %106, %120 : vector<8x1xf32>
    %123 = arith.subf %121, %122 : vector<8x1xf32>
    %124 = vector.broadcast %120 : vector<8x1xf32> to vector<8x256xf32>
    %125 = arith.mulf %102, %124 : vector<8x256xf32>
    %126 = vector.broadcast %123 : vector<8x1xf32> to vector<8x256xf32>
    %127 = arith.addf %125, %126 : vector<8x256xf32>
    %cst_69 = arith.constant 0.00999999977 : f32
    %128 = vector.broadcast %cst_69 : f32 to vector<8x256xf32>
    %129 = arith.mulf %128, %127 : vector<8x256xf32>
    %130 = arith.maximumf %127, %129 : vector<8x256xf32>
    %131 = arith.truncf %130 : vector<8x256xf32> to vector<8x256xbf16>
    %c0_70 = arith.constant 0 : index
    %c17_71 = arith.constant 17 : index
    %132 = vector.load %arg8[%c0_70, %c17_71] : memref<8x290xbf16, #tpu.memory_space<vmem>>, vector<8x256xbf16>
    tpu.vector_store %arg8[%c0_70, %c17_71], %131 {strides = array<i32>} : memref<8x290xbf16, #tpu.memory_space<vmem>>, vector<8x256xbf16>,
    %cst_72 = arith.constant 0.000000e+00 : f32
    %133 = vector.broadcast %cst_72 : f32 to vector<8x256xf32>
    %c0_73 = arith.constant 0 : index
    %c0_74 = arith.constant 0 : index
    %134 = vector.load %arg8[%c0_73, %c0_74] : memref<8x290xbf16, #tpu.memory_space<vmem>>, vector<8x256xbf16>
    %135 = vector.broadcast %24 : vector<1x256xbf16> to vector<8x256xbf16>
    %136 = arith.mulf %134, %135 : vector<8x256xbf16>
    %c0_75 = arith.constant 0 : index
    %c0_76 = arith.constant 0 : index
    %c0_77 = arith.constant 0 : index
    %137 = vector.load %arg4[%c0_75, %c0_76, %c0_77] : memref<9x8x8xbf16, #tpu.memory_space<vmem>>, vector<1x8x8xbf16>
    %138 = vector.shape_cast %137 : vector<1x8x8xbf16> to vector<8x8xbf16>
    %cst_78 = arith.constant dense<0.000000e+00> : vector<8x256xf32>
    %139 = tpu.matmul %138, %136, %cst_78 {dimension_numbers = #tpu.dot_dimension_numbers<[1], [0], [0], [1], [0, 0, 1, 1], [], []>} : vector<8x8xbf16>, vector<8x256xbf16>, vector<8x256xf32> -> vector<8x256xf32>
    %140 = arith.addf %133, %139 : vector<8x256xf32>
    %c0_79 = arith.constant 0 : index
    %c1_80 = arith.constant 1 : index
    %141 = vector.load %arg8[%c0_79, %c1_80] : memref<8x290xbf16, #tpu.memory_space<vmem>>, vector<8x256xbf16>
    %c1_81 = arith.constant 1 : index
    %c0_82 = arith.constant 0 : index
    %c0_83 = arith.constant 0 : index
    %142 = vector.load %arg4[%c1_81, %c0_82, %c0_83] : memref<9x8x8xbf16, #tpu.memory_space<vmem>>, vector<1x8x8xbf16>
    %143 = vector.shape_cast %142 : vector<1x8x8xbf16> to vector<8x8xbf16>
    %cst_84 = arith.constant dense<0.000000e+00> : vector<8x256xf32>
    %144 = tpu.matmul %143, %141, %cst_84 {dimension_numbers = #tpu.dot_dimension_numbers<[1], [0], [0], [1], [0, 0, 1, 1], [], []>} : vector<8x8xbf16>, vector<8x256xbf16>, vector<8x256xf32> -> vector<8x256xf32>
    %145 = arith.addf %140, %144 : vector<8x256xf32>
    %c0_85 = arith.constant 0 : index
    %c2_86 = arith.constant 2 : index
    %146 = vector.load %arg8[%c0_85, %c2_86] : memref<8x290xbf16, #tpu.memory_space<vmem>>, vector<8x256xbf16>
    %147 = vector.broadcast %32 : vector<1x256xbf16> to vector<8x256xbf16>
    %148 = arith.mulf %146, %147 : vector<8x256xbf16>
    %c2_87 = arith.constant 2 : index
    %c0_88 = arith.constant 0 : index
    %c0_89 = arith.constant 0 : index
    %149 = vector.load %arg4[%c2_87, %c0_88, %c0_89] : memref<9x8x8xbf16, #tpu.memory_space<vmem>>, vector<1x8x8xbf16>
    %150 = vector.shape_cast %149 : vector<1x8x8xbf16> to vector<8x8xbf16>
    %cst_90 = arith.constant dense<0.000000e+00> : vector<8x256xf32>
    %151 = tpu.matmul %150, %148, %cst_90 {dimension_numbers = #tpu.dot_dimension_numbers<[1], [0], [0], [1], [0, 0, 1, 1], [], []>} : vector<8x8xbf16>, vector<8x256xbf16>, vector<8x256xf32> -> vector<8x256xf32>
    %152 = arith.addf %145, %151 : vector<8x256xf32>
    %c0_91 = arith.constant 0 : index
    %c16_92 = arith.constant 16 : index
    %153 = vector.load %arg8[%c0_91, %c16_92] : memref<8x290xbf16, #tpu.memory_space<vmem>>, vector<8x256xbf16>
    %154 = vector.broadcast %24 : vector<1x256xbf16> to vector<8x256xbf16>
    %155 = arith.mulf %153, %154 : vector<8x256xbf16>
    %c3_93 = arith.constant 3 : index
    %c0_94 = arith.constant 0 : index
    %c0_95 = arith.constant 0 : index
    %156 = vector.load %arg4[%c3_93, %c0_94, %c0_95] : memref<9x8x8xbf16, #tpu.memory_space<vmem>>, vector<1x8x8xbf16>
    %157 = vector.shape_cast %156 : vector<1x8x8xbf16> to vector<8x8xbf16>
    %cst_96 = arith.constant dense<0.000000e+00> : vector<8x256xf32>
    %158 = tpu.matmul %157, %155, %cst_96 {dimension_numbers = #tpu.dot_dimension_numbers<[1], [0], [0], [1], [0, 0, 1, 1], [], []>} : vector<8x8xbf16>, vector<8x256xbf16>, vector<8x256xf32> -> vector<8x256xf32>
    %159 = arith.addf %152, %158 : vector<8x256xf32>
    %c0_97 = arith.constant 0 : index
    %c17_98 = arith.constant 17 : index
    %160 = vector.load %arg8[%c0_97, %c17_98] : memref<8x290xbf16, #tpu.memory_space<vmem>>, vector<8x256xbf16>
    %c4_99 = arith.constant 4 : index
    %c0_100 = arith.constant 0 : index
    %c0_101 = arith.constant 0 : index
    %161 = vector.load %arg4[%c4_99, %c0_100, %c0_101] : memref<9x8x8xbf16, #tpu.memory_space<vmem>>, vector<1x8x8xbf16>
    %162 = vector.shape_cast %161 : vector<1x8x8xbf16> to vector<8x8xbf16>
    %cst_102 = arith.constant dense<0.000000e+00> : vector<8x256xf32>
    %163 = tpu.matmul %162, %160, %cst_102 {dimension_numbers = #tpu.dot_dimension_numbers<[1], [0], [0], [1], [0, 0, 1, 1], [], []>} : vector<8x8xbf16>, vector<8x256xbf16>, vector<8x256xf32> -> vector<8x256xf32>
    %164 = arith.addf %159, %163 : vector<8x256xf32>
    %c0_103 = arith.constant 0 : index
    %c18_104 = arith.constant 18 : index
    %165 = vector.load %arg8[%c0_103, %c18_104] : memref<8x290xbf16, #tpu.memory_space<vmem>>, vector<8x256xbf16>
    %166 = vector.broadcast %32 : vector<1x256xbf16> to vector<8x256xbf16>
    %167 = arith.mulf %165, %166 : vector<8x256xbf16>
    %c5_105 = arith.constant 5 : index
    %c0_106 = arith.constant 0 : index
    %c0_107 = arith.constant 0 : index
    %168 = vector.load %arg4[%c5_105, %c0_106, %c0_107] : memref<9x8x8xbf16, #tpu.memory_space<vmem>>, vector<1x8x8xbf16>
    %169 = vector.shape_cast %168 : vector<1x8x8xbf16> to vector<8x8xbf16>
    %cst_108 = arith.constant dense<0.000000e+00> : vector<8x256xf32>
    %170 = tpu.matmul %169, %167, %cst_108 {dimension_numbers = #tpu.dot_dimension_numbers<[1], [0], [0], [1], [0, 0, 1, 1], [], []>} : vector<8x8xbf16>, vector<8x256xbf16>, vector<8x256xf32> -> vector<8x256xf32>
    %171 = arith.addf %164, %170 : vector<8x256xf32>
    %c0_109 = arith.constant 0 : index
    %c32_110 = arith.constant 32 : index
    %172 = vector.load %arg8[%c0_109, %c32_110] : memref<8x290xbf16, #tpu.memory_space<vmem>>, vector<8x256xbf16>
    %173 = vector.broadcast %24 : vector<1x256xbf16> to vector<8x256xbf16>
    %174 = arith.mulf %172, %173 : vector<8x256xbf16>
    %c6_111 = arith.constant 6 : index
    %c0_112 = arith.constant 0 : index
    %c0_113 = arith.constant 0 : index
    %175 = vector.load %arg4[%c6_111, %c0_112, %c0_113] : memref<9x8x8xbf16, #tpu.memory_space<vmem>>, vector<1x8x8xbf16>
    %176 = vector.shape_cast %175 : vector<1x8x8xbf16> to vector<8x8xbf16>
    %cst_114 = arith.constant dense<0.000000e+00> : vector<8x256xf32>
    %177 = tpu.matmul %176, %174, %cst_114 {dimension_numbers = #tpu.dot_dimension_numbers<[1], [0], [0], [1], [0, 0, 1, 1], [], []>} : vector<8x8xbf16>, vector<8x256xbf16>, vector<8x256xf32> -> vector<8x256xf32>
    %178 = arith.addf %171, %177 : vector<8x256xf32>
    %c0_115 = arith.constant 0 : index
    %c33_116 = arith.constant 33 : index
    %179 = vector.load %arg8[%c0_115, %c33_116] : memref<8x290xbf16, #tpu.memory_space<vmem>>, vector<8x256xbf16>
    %c7_117 = arith.constant 7 : index
    %c0_118 = arith.constant 0 : index
    %c0_119 = arith.constant 0 : index
    %180 = vector.load %arg4[%c7_117, %c0_118, %c0_119] : memref<9x8x8xbf16, #tpu.memory_space<vmem>>, vector<1x8x8xbf16>
    %181 = vector.shape_cast %180 : vector<1x8x8xbf16> to vector<8x8xbf16>
    %cst_120 = arith.constant dense<0.000000e+00> : vector<8x256xf32>
    %182 = tpu.matmul %181, %179, %cst_120 {dimension_numbers = #tpu.dot_dimension_numbers<[1], [0], [0], [1], [0, 0, 1, 1], [], []>} : vector<8x8xbf16>, vector<8x256xbf16>, vector<8x256xf32> -> vector<8x256xf32>
    %183 = arith.addf %178, %182 : vector<8x256xf32>
    %c0_121 = arith.constant 0 : index
    %c34_122 = arith.constant 34 : index
    %184 = vector.load %arg8[%c0_121, %c34_122] : memref<8x290xbf16, #tpu.memory_space<vmem>>, vector<8x256xbf16>
    %185 = vector.broadcast %32 : vector<1x256xbf16> to vector<8x256xbf16>
    %186 = arith.mulf %184, %185 : vector<8x256xbf16>
    %c8_123 = arith.constant 8 : index
    %c0_124 = arith.constant 0 : index
    %c0_125 = arith.constant 0 : index
    %187 = vector.load %arg4[%c8_123, %c0_124, %c0_125] : memref<9x8x8xbf16, #tpu.memory_space<vmem>>, vector<1x8x8xbf16>
    %188 = vector.shape_cast %187 : vector<1x8x8xbf16> to vector<8x8xbf16>
    %cst_126 = arith.constant dense<0.000000e+00> : vector<8x256xf32>
    %189 = tpu.matmul %188, %186, %cst_126 {dimension_numbers = #tpu.dot_dimension_numbers<[1], [0], [0], [1], [0, 0, 1, 1], [], []>} : vector<8x8xbf16>, vector<8x256xbf16>, vector<8x256xf32> -> vector<8x256xf32>
    %190 = arith.addf %183, %189 : vector<8x256xf32>
    %cst_127 = arith.constant dense<0.000000e+00> : vector<8xf32>
    %191 = vector.multi_reduction <add>, %190, %cst_127 [1] : vector<8x256xf32> to vector<8xf32>
    %192 = vector.shape_cast %191 : vector<8xf32> to vector<8x1xf32>
    %cst_128 = arith.constant 3.906250e-03 : f32
    %193 = vector.broadcast %cst_128 : f32 to vector<8x1xf32>
    %194 = arith.mulf %192, %193 : vector<8x1xf32>
    %195 = arith.mulf %190, %190 : vector<8x256xf32>
    %cst_129 = arith.constant dense<0.000000e+00> : vector<8xf32>
    %196 = vector.multi_reduction <add>, %195, %cst_129 [1] : vector<8x256xf32> to vector<8xf32>
    %197 = vector.shape_cast %196 : vector<8xf32> to vector<8x1xf32>
    %cst_130 = arith.constant 3.906250e-03 : f32
    %198 = vector.broadcast %cst_130 : f32 to vector<8x1xf32>
    %199 = arith.mulf %197, %198 : vector<8x1xf32>
    %200 = arith.mulf %194, %194 : vector<8x1xf32>
    %201 = arith.subf %199, %200 : vector<8x1xf32>
    %cst_131 = arith.constant 0.000000e+00 : f32
    %202 = vector.broadcast %cst_131 : f32 to vector<8x1xf32>
    %203 = arith.maximumf %201, %202 : vector<8x1xf32>
    %c0_132 = arith.constant 0 : index
    %c0_133 = arith.constant 0 : index
    %204 = vector.load %arg5[%c0_132, %c0_133] : memref<8x2xf32, #tpu.memory_space<vmem>>, vector<8x1xf32>
    %cst_134 = arith.constant 9.99999974E-6 : f32
    %205 = vector.broadcast %cst_134 : f32 to vector<8x1xf32>
    %206 = arith.addf %203, %205 : vector<8x1xf32>
    %207 = math.rsqrt %206 : vector<8x1xf32>
    %208 = arith.mulf %204, %207 : vector<8x1xf32>
    %c0_135 = arith.constant 0 : index
    %c1_136 = arith.constant 1 : index
    %209 = vector.load %arg5[%c0_135, %c1_136] : memref<8x2xf32, #tpu.memory_space<vmem>>, vector<8x1xf32>
    %210 = arith.mulf %194, %208 : vector<8x1xf32>
    %211 = arith.subf %209, %210 : vector<8x1xf32>
    %212 = vector.broadcast %208 : vector<8x1xf32> to vector<8x256xf32>
    %213 = arith.mulf %190, %212 : vector<8x256xf32>
    %214 = vector.broadcast %211 : vector<8x1xf32> to vector<8x256xf32>
    %215 = arith.addf %213, %214 : vector<8x256xf32>
    %cst_137 = arith.constant 0.00999999977 : f32
    %216 = vector.broadcast %cst_137 : f32 to vector<8x256xf32>
    %217 = arith.mulf %216, %215 : vector<8x256xf32>
    %218 = arith.maximumf %215, %217 : vector<8x256xf32>
    %c0_138 = arith.constant 0 : index
    %c0_139 = arith.constant 0 : index
    %c0_140 = arith.constant 0 : index
    %219 = vector.load %arg6[%c0_138, %c0_139, %c0_140] : memref<1x8x256xf32, #tpu.memory_space<vmem>>, vector<1x8x256xf32>
    %220 = vector.shape_cast %219 : vector<1x8x256xf32> to vector<8x256xf32>
    %221 = vector.shape_cast %218 : vector<8x256xf32> to vector<1x8x256xf32>
    tpu.vector_store %arg6[%c0_138, %c0_139, %c0_140], %221 {strides = array<i32>} : memref<1x8x256xf32, #tpu.memory_space<vmem>>, vector<1x8x256xf32>,
    return
  }
  func.func @transform_0(%arg0: i32) -> (i32, i32, i32) {
    %c0_i32 = arith.constant 0 : i32
    %c0_i32_0 = arith.constant 0 : i32
    %c0_i32_1 = arith.constant 0 : i32
    return %arg0, %c0_i32, %c0_i32_0 : i32, i32, i32
  }
  func.func @transform_1(%arg0: i32) -> (i32, i32, i32) {
    %c0_i32 = arith.constant 0 : i32
    %c0_i32_0 = arith.constant 0 : i32
    %c0_i32_1 = arith.constant 0 : i32
    %c0_i32_2 = arith.constant 0 : i32
    return %c0_i32, %c0_i32_0, %c0_i32_1 : i32, i32, i32
  }
  func.func @transform_2(%arg0: i32) -> (i32, i32) {
    %c0_i32 = arith.constant 0 : i32
    %c0_i32_0 = arith.constant 0 : i32
    %c0_i32_1 = arith.constant 0 : i32
    return %c0_i32, %c0_i32_0 : i32, i32
  }
  func.func @transform_3(%arg0: i32) -> (i32, i32, i32) {
    %c0_i32 = arith.constant 0 : i32
    %c0_i32_0 = arith.constant 0 : i32
    %c0_i32_1 = arith.constant 0 : i32
    %c0_i32_2 = arith.constant 0 : i32
    return %c0_i32, %c0_i32_0, %c0_i32_1 : i32, i32, i32
  }
  func.func @transform_4(%arg0: i32) -> (i32, i32) {
    %c0_i32 = arith.constant 0 : i32
    %c0_i32_0 = arith.constant 0 : i32
    %c0_i32_1 = arith.constant 0 : i32
    return %c0_i32, %c0_i32_0 : i32, i32
  }
  func.func @transform_5(%arg0: i32) -> (i32, i32, i32) {
    %c0_i32 = arith.constant 0 : i32
    %c0_i32_0 = arith.constant 0 : i32
    %c0_i32_1 = arith.constant 0 : i32
    return %arg0, %c0_i32, %c0_i32_0 : i32, i32, i32
  }
}

</mosaic_0001>

<llo_original>
// kernel: tpu_custom_call.1
$region0: #{tpu_custom_call.1}
  #allocation0 [shape = 'u32[]', space=smem, size = 0x4, offset = 0x4, fixed_abs, tag = 'smem constant byte address 0x4 - core index']
  #allocation1 [shape = 'u32[72,128]{1,0:T(1,128)}', space=vmem, size = 0x9000, scoped, tag = 'internal scratch']
  #allocation2 [shape = 'bf16[4,290]{1,0:T(4,128)(2,1)}', space=vmem, size = 0xc00, scoped, tag = 'scratch operand']
  #allocation3 [shape = 'bf16[8,290]{1,0:T(8,128)(2,1)}', space=vmem, size = 0x1800, scoped, tag = 'scratch operand']
  %s0 = inlined_call_operand.vmem [shape: f32[2,4,256], index: 0, kind: input, shape index: {}]
  %s1 = inlined_call_operand.vmem [shape: bf16[9,8,4], index: 1, kind: input, shape index: {}]
  %s2 = inlined_call_operand.vmem [shape: f32[8,2], index: 2, kind: input, shape index: {}]
  %s3 = inlined_call_operand.vmem [shape: bf16[9,8,8], index: 3, kind: input, shape index: {}]
  %s4 = inlined_call_operand.vmem [shape: f32[8,2], index: 4, kind: input, shape index: {}]
  %s5 = inlined_call_operand.hbm [shape: f32[2,8,256], index: 5, kind: output, shape index: {}]
  %s6 = sld [smem:[#allocation0]]
  $region53: #{tpu_custom_call.1} parent=0
    _
  %s8 = ssub.s32 1, %s6
  %s9 = scalar_select 0, %s8, %s6
  $region1: #{tpu_custom_call.1} parent=0
    #allocation4 [shape = 'u8[16384]{0}', space=vmem, size = 0x4000, scoped, tag = 'output window, operand 0']
    #allocation5 [shape = 's32[2]{0}', space=sflag, size = 0x8, scoped, tag = 'scoped memory for tpu_custom_call.1']
    %10 = vsyncpa [#allocation5], 0
    %s11 = scalar_lea.sflag [#allocation5], 1
    %12 = vsyncpa %s11, 0
    loop: start=0, step=1, limit=4
    $region2: #{tpu_custom_call.1} parent=1 // loop_pre_header
      _
    $region3: #{tpu_custom_call.1} parent=1 // loop_header
      %s14 = sphi 0, %s18
      %p15 = scmp.ge.s32.totalorder %s14, 4
      %s24 = sphi 0, %s26
      %s27 = sphi 0, %s24
      %s28 = sphi 0, %s27
      %s44 = sphi 0, %s28
      %s48 = sphi 0, %s48
      %s50 = sphi 0, %s48
      %s51 = sphi 0, %s50
      %s65 = sphi 0, %s51
      %s69 = sphi 0, %s69
      %s71 = sphi 0, %s69
      %s72 = sphi 0, %s71
      %s86 = sphi 0, %s72
      %s90 = sphi 0, %s90
      %s92 = sphi 0, %s90
      %s93 = sphi 0, %s92
      %s107 = sphi 0, %s93
      %s111 = sphi 0, %s111
      %s113 = sphi 0, %s111
      %s114 = sphi 0, %s113
      %s128 = sphi 0, %s114
      %s134 = sphi 0, %s136
      %s137 = sphi 0, %s134
      %s138 = sphi 0, %s137
      %s154 = sphi 0, %s138
    $region4: #{tpu_custom_call.1} parent=1 // loop_header_branch
      %17 = sbr.rel (%p15) target = $region8
    $region5: #{tpu_custom_call.1} parent=1 // loop_body
      %s19 = ssub.s32 %s14, 1
      %s20 = ssub.s32 %s14, 2
      %s21 = sadd.s32 %s14, 1
      %s22 = ssub.s32 %s14, %s21
      %p23 = scmp.eq.s32.totalorder %s22, 0
      %s25 = sadd.s32 %s24, 1
      %s26 = scalar_select %p23, %s24, %s25
      %p29 = pneg %p23
      %p30 = scmp.eq.s32.totalorder %s14, 1
      %p31 = por %p29, %p30
      %p32 = scmp.ne.s32.totalorder %s24, %s27
      %p33 = scmp.eq.s32.totalorder %s14, 0
      %p34 = por %p32, %p33
      %p35 = scmp.ne.s32.totalorder %s24, %s27
      %p36 = scmp.eq.s32.totalorder %s19, 1
      %p37 = por %p35, %p36
      %p38 = scmp.ne.s32.totalorder %s27, %s28
      %p39 = scmp.eq.s32.totalorder %s19, 0
      %p40 = por %p38, %p39
      %p41 = scmp.ne.s32.totalorder %s27, %s28
      %p42 = scmp.eq.s32.totalorder %s20, 1
      %p43 = por %p41, %p42
      %p45 = scmp.ne.s32.totalorder %s28, %s44
      %p46 = scmp.eq.s32.totalorder %s20, 0
      %p47 = por %p45, %p46
      %s49 = sadd.s32 %s48, 1
      %p52 = scmp.eq.s32.totalorder %s14, 1
      %p53 = scmp.ne.s32.totalorder %s48, %s50
      %p54 = scmp.eq.s32.totalorder %s14, 0
      %p55 = por %p53, %p54
      %p56 = scmp.ne.s32.totalorder %s48, %s50
      %p57 = scmp.eq.s32.totalorder %s19, 1
      %p58 = por %p56, %p57
      %p59 = scmp.ne.s32.totalorder %s50, %s51
      %p60 = scmp.eq.s32.totalorder %s19, 0
      %p61 = por %p59, %p60
      %p62 = scmp.ne.s32.totalorder %s50, %s51
      %p63 = scmp.eq.s32.totalorder %s20, 1
      %p64 = por %p62, %p63
      %p66 = scmp.ne.s32.totalorder %s51, %s65
      %p67 = scmp.eq.s32.totalorder %s20, 0
      %p68 = por %p66, %p67
      %s70 = sadd.s32 %s69, 1
      %p73 = scmp.eq.s32.totalorder %s14, 1
      %p74 = scmp.ne.s32.totalorder %s69, %s71
      %p75 = scmp.eq.s32.totalorder %s14, 0
      %p76 = por %p74, %p75
      %p77 = scmp.ne.s32.totalorder %s69, %s71
      %p78 = scmp.eq.s32.totalorder %s19, 1
      %p79 = por %p77, %p78
      %p80 = scmp.ne.s32.totalorder %s71, %s72
      %p81 = scmp.eq.s32.totalorder %s19, 0
      %p82 = por %p80, %p81
      %p83 = scmp.ne.s32.totalorder %s71, %s72
      %p84 = scmp.eq.s32.totalorder %s20, 1
      %p85 = por %p83, %p84
      %p87 = scmp.ne.s32.totalorder %s72, %s86
      %p88 = scmp.eq.s32.totalorder %s20, 0
      %p89 = por %p87, %p88
      %s91 = sadd.s32 %s90, 1
      %p94 = scmp.eq.s32.totalorder %s14, 1
      %p95 = scmp.ne.s32.totalorder %s90, %s92
      %p96 = scmp.eq.s32.totalorder %s14, 0
      %p97 = por %p95, %p96
      %p98 = scmp.ne.s32.totalorder %s90, %s92
      %p99 = scmp.eq.s32.totalorder %s19, 1
      %p100 = por %p98, %p99
      %p101 = scmp.ne.s32.totalorder %s92, %s93
      %p102 = scmp.eq.s32.totalorder %s19, 0
      %p103 = por %p101, %p102
      %p104 = scmp.ne.s32.totalorder %s92, %s93
      %p105 = scmp.eq.s32.totalorder %s20, 1
      %p106 = por %p104, %p105
      %p108 = scmp.ne.s32.totalorder %s93, %s107
      %p109 = scmp.eq.s32.totalorder %s20, 0
      %p110 = por %p108, %p109
      %s112 = sadd.s32 %s111, 1
      %p115 = scmp.eq.s32.totalorder %s14, 1
      %p116 = scmp.ne.s32.totalorder %s111, %s113
      %p117 = scmp.eq.s32.totalorder %s14, 0
      %p118 = por %p116, %p117
      %p119 = scmp.ne.s32.totalorder %s111, %s113
      %p120 = scmp.eq.s32.totalorder %s19, 1
      %p121 = por %p119, %p120
      %p122 = scmp.ne.s32.totalorder %s113, %s114
      %p123 = scmp.eq.s32.totalorder %s19, 0
      %p124 = por %p122, %p123
      %p125 = scmp.ne.s32.totalorder %s113, %s114
      %p126 = scmp.eq.s32.totalorder %s20, 1
      %p127 = por %p125, %p126
      %p129 = scmp.ne.s32.totalorder %s114, %s128
      %p130 = scmp.eq.s32.totalorder %s20, 0
      %p131 = por %p129, %p130
      %s132 = ssub.s32 %s14, %s21
      %p133 = scmp.eq.s32.totalorder %s132, 0
      %s135 = sadd.s32 %s134, 1
      %s136 = scalar_select %p133, %s134, %s135
      %p139 = pneg %p133
      %p140 = scmp.eq.s32.totalorder %s14, 1
      %p141 = por %p139, %p140
      %p142 = scmp.ne.s32.totalorder %s134, %s137
      %p143 = scmp.eq.s32.totalorder %s14, 0
      %p144 = por %p142, %p143
      %p145 = scmp.ne.s32.totalorder %s134, %s137
      %p146 = scmp.eq.s32.totalorder %s19, 1
      %p147 = por %p145, %p146
      %p148 = scmp.ne.s32.totalorder %s137, %s138
      %p149 = scmp.eq.s32.totalorder %s19, 0
      %p150 = por %p148, %p149
      %p151 = scmp.ne.s32.totalorder %s137, %s138
      %p152 = scmp.eq.s32.totalorder %s20, 1
      %p153 = por %p151, %p152
      %p155 = scmp.ne.s32.totalorder %s138, %s154
      %p156 = scmp.eq.s32.totalorder %s20, 0
      %p157 = por %p155, %p156
      %p158 = scmp.le.s32.totalorder 1, %s14
      %p159 = scmp.lt.s32.totalorder %s14, 3
      %p160 = pnand %p158, %p159
      %p161 = pneg %p160
      // Predicated region
      $region9: #{tpu_custom_call.1} parent=5 // pred_check
        _
      $region10: #{tpu_custom_call.1} parent=5 // pred_check_branch
        %163 = sbr.rel (%p160) target = $region12
      $region11: #{tpu_custom_call.1} parent=5 // pred_region
        %s164 = ssub.s32 %s14, 1
        // Predicated region
        $region13: #{tpu_custom_call.1} parent=11 // pred_check
          %p165 = pneg %p61
        $region14: #{tpu_custom_call.1} parent=11 // pred_check_branch
          %167 = sbr.rel (%p165) target = $region16
        $region15: #{tpu_custom_call.1} parent=11 // pred_region
          _
        $region16: #{tpu_custom_call.1} parent=11 // pred_fallthru
          _
        // Predicated region
        $region17: #{tpu_custom_call.1} parent=11 // pred_check
          %p168 = pneg %p82
        $region18: #{tpu_custom_call.1} parent=11 // pred_check_branch
          %170 = sbr.rel (%p168) target = $region20
        $region19: #{tpu_custom_call.1} parent=11 // pred_region
          _
        $region20: #{tpu_custom_call.1} parent=11 // pred_fallthru
          _
        // Predicated region
        $region21: #{tpu_custom_call.1} parent=11 // pred_check
          %p171 = pneg %p103
        $region22: #{tpu_custom_call.1} parent=11 // pred_check_branch
          %173 = sbr.rel (%p171) target = $region24
        $region23: #{tpu_custom_call.1} parent=11 // pred_region
          _
        $region24: #{tpu_custom_call.1} parent=11 // pred_fallthru
          _
        // Predicated region
        $region25: #{tpu_custom_call.1} parent=11 // pred_check
          %p174 = pneg %p124
        $region26: #{tpu_custom_call.1} parent=11 // pred_check_branch
          %176 = sbr.rel (%p174) target = $region28
        $region27: #{tpu_custom_call.1} parent=11 // pred_region
          _
        $region28: #{tpu_custom_call.1} parent=11 // pred_fallthru
          _
      $region12: #{tpu_custom_call.1} parent=5 // pred_fallthru
        _
      %p177 = scmp.lt.s32.totalorder %s14, 2
      // Predicated region
      $region29: #{tpu_custom_call.1} parent=5 // pred_check
        %p178 = pneg %p177
      $region30: #{tpu_custom_call.1} parent=5 // pred_check_branch
        %180 = sbr.rel (%p178) target = $region32
      $region31: #{tpu_custom_call.1} parent=5 // pred_region
        // Predicated region
        $region33: #{tpu_custom_call.1} parent=31 // pred_check
          %p181 = pneg %p34
        $region34: #{tpu_custom_call.1} parent=31 // pred_check_branch
          %183 = sbr.rel (%p181) target = $region36
        $region35: #{tpu_custom_call.1} parent=31 // pred_region
          %p184 = scmp.lt.s32.totalorder %s14, 1
          %s185 = scalar_select %p184, %s14, 1
          %s186 = smul.addr %s185, 2
          %s187 = smul.addr %s186, 4
          %s188 = scalar_lea.vmem %s0, %s187
        $region36: #{tpu_custom_call.1} parent=31 // pred_fallthru
          _
      $region32: #{tpu_custom_call.1} parent=5 // pred_fallthru
        _
      %p189 = scmp.le.s32.totalorder 1, %s14
      %p190 = scmp.lt.s32.totalorder %s14, 3
      %p191 = pnand %p189, %p190
      %p192 = pneg %p191
      // Predicated region
      $region37: #{tpu_custom_call.1} parent=5 // pred_check
        _
      $region38: #{tpu_custom_call.1} parent=5 // pred_check_branch
        %194 = sbr.rel (%p191) target = $region40
      $region39: #{tpu_custom_call.1} parent=5 // pred_region
        %s195 = ssub.s32 %s14, 1
        %p196 = scmp.lt.s32.totalorder %s19, 1
        %s197 = scalar_select %p196, %s19, 1
        %s198 = smul.addr %s197, 2
        %s199 = smul.addr %s198, 4
        %s200 = scalar_lea.vmem %s0, %s199
        %p201 = pneg %p40
        %p202 = pneg %p37
        %p203 = pneg %p61
        %p204 = pneg %p58
        %p205 = pneg %p82
        %p206 = pneg %p79
        %p207 = pneg %p103
        %p208 = pneg %p100
        %p209 = pneg %p124
        %p210 = pneg %p121
        %p211 = pneg %p150
        %p212 = pneg %p147
        %s213 = sand.u32 %s137, 1
        %s214 = scalar_lea.sflag [#allocation5], %s213
        %s215 = sand.u32 %s137, 1
        %s216 = smul.addr %s215, 16
        %s217 = scalar_lea.vmem [#allocation4], %s216
        %p218 = scmp.lt.s32.totalorder %s19, 1
        %s219 = scalar_select %p218, %s19, 1
        %s220 = smul.addr %s219, 2
        %s221 = smul.addr %s220, 4
        %s222 = scalar_lea.vmem %s0, %s221
        %v224 = vlaneseq
        %v225 = vand.u32 %v224, 127
        %v226 = vadd.s32 %v225, 128
        %vm227 = vcmp.lt.s32.totalorder %v225, 0
        %v228 = vsub.s32 0, %v225
        %v229 = vsel %vm227, %v228, %v225
        %v230 = vshrl.u32 %v229, 4
        %v231 = vand.u32 %v229, 15
        %v232 = vsub.s32 0, %v231
        %v233 = vsel %vm227, %v232, %v231
        %vm234 = vcmp.lt.s32.totalorder %v226, 0
        %v235 = vsub.s32 0, %v226
        %v236 = vsel %vm234, %v235, %v226
        %v237 = vshrl.u32 %v236, 4
        %v238 = vand.u32 %v236, 15
        %v239 = vsub.s32 0, %v238
        %v240 = vsel %vm234, %v239, %v238
        %vm241 = vcmp.ne.s32.totalorder %v233, 0
        %vm242 = vcmp.ne.s32.totalorder %v240, 0
        %vm243 = vcmp.lt.s32.totalorder %v233, 0
        %vm244 = vcmp.lt.s32.totalorder %v240, 0
        %vm245 = vmand %vm243, %vm241
        %vm246 = vmand %vm244, %vm242
        %v247 = vadd.s32 %v233, 16
        %v248 = vadd.s32 %v240, 16
        %v249 = vsel %vm245, %v247, %v233
        %v250 = vsel %vm246, %v248, %v240
        %vm251 = vcmp.ge.s32.totalorder %v249, 1
        %vm252 = vcmp.ge.s32.totalorder %v250, 1
        %vm253 = vcmp.lt.s32.totalorder %v249, 17
        %vm254 = vcmp.lt.s32.totalorder %v250, 17
        %vm255 = vmand %vm251, %vm253
        %vm256 = vmand %vm252, %vm254
        %v257 = vsel %vm255, 1, 0
        %v258 = vsel %vm256, 1, 0
        %v259 = vcvt.s32.f32 %v257
        %v260 = vcvt.s32.f32 %v258
        %v261 = vpack.c.bf16 %v260, %v259
        %vm262 = vcmp.ge.s32.totalorder %v249, 4294967295
        %vm263 = vcmp.ge.s32.totalorder %v250, 4294967295
        %vm264 = vcmp.lt.s32.totalorder %v249, 15
        %vm265 = vcmp.lt.s32.totalorder %v250, 15
        %vm266 = vmand %vm262, %vm264
        %vm267 = vmand %vm263, %vm265
        %v268 = vsel %vm266, 1, 0
        %v269 = vsel %vm267, 1, 0
        %v270 = vcvt.s32.f32 %v268
        %v271 = vcvt.s32.f32 %v269
        %v272 = vpack.c.bf16 %v271, %v270
        %vm273 = vcmask 132096
        %274 = vst.msk [vmem:[#allocation2] sm:$0x3] %vm273, 0
        %vm275 = vcmask 271496
        %276 = vst.msk [vmem:[#allocation2 + $0x4] sm:$0x3] %vm275, 0
        %vm277 = vcmask 134144
        %278 = vst.msk [vmem:[#allocation3] sm:$0xf] %vm277, 0
        %vm279 = vcmask 273544
        %280 = vst.msk [vmem:[#allocation3 + $0x8] sm:$0xf] %vm279, 0
        %v281 = vld [vmem:[%s222] sm:$0xff]
        %283 = vst [vmem:[#allocation1] ss:$2 sm:$0xff] %v281
        %v284 = vld.sshfl [vmem:[#allocation1] sm:$0xff pattern:$0x75316420]
        %v285 = vld.sshfl [vmem:[#allocation1 + $0x8] sm:$0xff pattern:$0x75316420]
        %v288 = vpack.c.bf16 %v285, %v284
        %v290 = vrot.slane %v288, 2
        %vm291 = vcmask 1041408
        %v294 = vsel %vm291, %v288, %v290
        %296 = vrot.lane.b32.xlu0 %v294, 17
        %v297 = vpop.permute.xlu0 %296
        %v298 = vrot.slane %v297, 6
        %vm299 = vcmask 138240
        %v300 = vsel %vm299, %v298, %v297
        %vm302 = vcmask 1041544
        %vm303 = vcmask 1043458
        %vm304 = vmor %vm303, %vm302
        %vm305 = vcmask 136196
        %vm306 = vmor %vm305, %vm304
        %307 = vst.msk [vmem:[#allocation2] sm:$0x3f] %vm306, %v300
        %v308 = vld [vmem:[#allocation2] sm:$0xf]
        %v309 = vunpack.c.l.bf16 %v308
        %v310 = vunpack.c.l.bf16 %v261
        %v311 = vunpack.c.h.bf16 %v261
        %v314 = vrot.slane %v311, 4
        %vm315 = vcmask 1043456
        %v316 = vsel %vm315, %v310, %v314
        %v318 = vmul.f32 %v309, %v316
        %320 = vst [vmem:[#allocation1] ss:$2 sm:$0xff] %v318
        %v321 = vld.sshfl [vmem:[#allocation1] sm:$0xff pattern:$0x75316420]
        %v322 = vld.sshfl [vmem:[#allocation1 + $0x8] sm:$0xff pattern:$0x75316420]
        %v325 = vpack.c.bf16 %v321, %v321
        %v326 = vpack.c.bf16 %v322, %v322
        %v327 = vld [vmem:[%s1] sm:$0xf]
        %v328 = vld [vmem:[#allocation2] sm:$0x3f]
        %s329 = scalar_lea.vmem %s1, 4
        %v330 = vld [vmem:[%s329] sm:$0xf]
        %332 = vst [vmem:[#allocation1] ss:$4 sm:$0xff] %v328
        %v333 = vld.sshfl [vmem:[#allocation1] sm:$0xff pattern:$0x73625140]
        %v335 = vld.sshfl [vmem:[#allocation1 + $0x8] sm:$0xff pattern:$0x73625140]
        %v337 = vld.sshfl [vmem:[#allocation1 + $0x10] sm:$0xff pattern:$0x73625140]
        %339 = vrot.lane.b32.xlu0 %v333, 127
        %v340 = vpop.permute.xlu0 %339
        %341 = vrot.lane.b32.xlu0 %v335, 127
        %v342 = vpop.permute.xlu0 %341
        %343 = vrot.lane.b32.xlu0 %v337, 127
        %v344 = vpop.permute.xlu0 %343
        %vm345 = vcmask 1039360
        %v346 = vsel %vm345, %v340, %v342
        %v347 = vsel %vm345, %v342, %v344
        %vm348 = vcmask 31744
        %v350 = vsel %vm348, %v330, 0
        %v353 = vsel %vm291, %v346, 0
        %v356 = vsel %vm291, %v347, 0
        %358 = vmatpush.bf16.msra.mxu0 0
        %359 = vmatpush.bf16.msra.mxu0 0
        %360 = vmatpush.bf16.msra.mxu0 0
        %361 = vmatpush.bf16.msra.mxu0 0
        %362 = vmatpush.bf16.msra.mxu0 0
        %363 = vmatpush.bf16.msra.mxu0 0
        %364 = vmatpush.bf16.msra.mxu0 0
        %365 = vmatpush.bf16.msra.mxu0 %v353
        %366 = vmatmul.bf16.gmra.mxu0 %v350
        %v367 = vpop.f32.mrf.mxu0
        %v368 = vadd.f32 0.0, %v367
        %v369 = vpop.f32.mrf.mxu0
        %370 = vdwg.mxu0
        %371 = vmatpush.bf16.msra.mxu0 0
        %372 = vmatpush.bf16.msra.mxu0 0
        %373 = vmatpush.bf16.msra.mxu0 0
        %374 = vmatpush.bf16.msra.mxu0 0
        %375 = vmatpush.bf16.msra.mxu0 0
        %376 = vmatpush.bf16.msra.mxu0 0
        %377 = vmatpush.bf16.msra.mxu0 0
        %378 = vmatpush.bf16.msra.mxu0 %v356
        %379 = vmatmul.bf16.gmra.mxu0 %v350
        %v380 = vpop.f32.mrf.mxu0
        %v381 = vadd.f32 0.0, %v380
        %v382 = vpop.f32.mrf.mxu0
        %383 = vdwg.mxu0
        %v385 = vsel %vm348, %v327, 0
        %v388 = vsel %vm291, %v325, 0
        %v391 = vsel %vm291, %v326, 0
        %393 = vmatpush.bf16.msra.mxu0 0
        %394 = vmatpush.bf16.msra.mxu0 0
        %395 = vmatpush.bf16.msra.mxu0 0
        %396 = vmatpush.bf16.msra.mxu0 0
        %397 = vmatpush.bf16.msra.mxu0 0
        %398 = vmatpush.bf16.msra.mxu0 0
        %399 = vmatpush.bf16.msra.mxu0 0
        %400 = vmatpush.bf16.msra.mxu0 %v388
        %401 = vmatmul.bf16.gmra.mxu0 %v385
        %v402 = vpop.f32.mrf.mxu0
        %v403 = vadd.f32 %v368, %v402
        %v404 = vpop.f32.mrf.mxu0
        %405 = vdwg.mxu0
        %406 = vmatpush.bf16.msra.mxu0 0
        %407 = vmatpush.bf16.msra.mxu0 0
        %408 = vmatpush.bf16.msra.mxu0 0
        %409 = vmatpush.bf16.msra.mxu0 0
        %410 = vmatpush.bf16.msra.mxu0 0
        %411 = vmatpush.bf16.msra.mxu0 0
        %412 = vmatpush.bf16.msra.mxu0 0
        %413 = vmatpush.bf16.msra.mxu0 %v391
        %414 = vmatmul.bf16.gmra.mxu0 %v385
        %v415 = vpop.f32.mrf.mxu0
        %v416 = vadd.f32 %v381, %v415
        %v417 = vpop.f32.mrf.mxu0
        %418 = vdwg.mxu0
        %v419 = vld [vmem:[#allocation2] sm:$0x3f]
        %v420 = vunpack.c.l.bf16 %v419
        %v421 = vunpack.c.h.bf16 %v419
        %v422 = vunpack.c.l.bf16 %v272
        %v423 = vunpack.c.h.bf16 %v272
        %v426 = vrot.slane %v423, 4
        %v427 = vsel %vm315, %v422, %v426
        %428 = vrot.lane.b32.xlu0 %v427, 2
        %v429 = vpop.permute.xlu0 %428
        %v430 = vrot.slane %v429, 4
        %vm431 = vcmask 15360
        %v432 = vsel %vm431, %v430, %v429
        %v435 = vmul.f32 %v420, %v432
        %v436 = vmul.f32 %v421, %v430
        %439 = vst [vmem:[#allocation1] ss:$2 sm:$0xff] %v435
        %s440 = scalar_lea.vmem [#allocation1], 16
        %441 = vst [vmem:[%s440] ss:$2 sm:$0xff] %v436
        %v442 = vld.sshfl [vmem:[#allocation1] sm:$0xff pattern:$0x75316420]
        %v443 = vld.sshfl [vmem:[#allocation1 + $0x8] sm:$0xff pattern:$0x75316420]
        %v444 = vld.sshfl [vmem:[#allocation1 + $0x10] sm:$0xff pattern:$0x75316420]
        %v448 = vpack.c.bf16 %v442, %v442
        %v449 = vpack.c.bf16 %v443, %v443
        %v450 = vpack.c.bf16 %v444, %v444
        %s451 = scalar_lea.vmem %s1, 8
        %v452 = vld [vmem:[%s451] sm:$0xf]
        %456 = vrot.lane.b32.xlu0 %v448, 126
        %v457 = vpop.permute.xlu0 %456
        %458 = vrot.lane.b32.xlu0 %v449, 126
        %v459 = vpop.permute.xlu0 %458
        %460 = vrot.lane.b32.xlu0 %v450, 126
        %v461 = vpop.permute.xlu0 %460
        %vm462 = vcmask 1031168
        %v463 = vsel %vm462, %v457, %v459
        %v464 = vsel %vm462, %v459, %v461
        %v466 = vsel %vm348, %v452, 0
        %v469 = vsel %vm291, %v463, 0
        %v472 = vsel %vm291, %v464, 0
        %474 = vmatpush.bf16.msra.mxu0 0
        %475 = vmatpush.bf16.msra.mxu0 0
        %476 = vmatpush.bf16.msra.mxu0 0
        %477 = vmatpush.bf16.msra.mxu0 0
        %478 = vmatpush.bf16.msra.mxu0 0
        %479 = vmatpush.bf16.msra.mxu0 0
        %480 = vmatpush.bf16.msra.mxu0 0
        %481 = vmatpush.bf16.msra.mxu0 %v469
        %482 = vmatmul.bf16.gmra.mxu0 %v466
        %v483 = vpop.f32.mrf.mxu0
        %v484 = vadd.f32 0.0, %v483
        %v485 = vpop.f32.mrf.mxu0
        %486 = vdwg.mxu0
        %487 = vmatpush.bf16.msra.mxu0 0
        %488 = vmatpush.bf16.msra.mxu0 0
        %489 = vmatpush.bf16.msra.mxu0 0
        %490 = vmatpush.bf16.msra.mxu0 0
        %491 = vmatpush.bf16.msra.mxu0 0
        %492 = vmatpush.bf16.msra.mxu0 0
        %493 = vmatpush.bf16.msra.mxu0 0
        %494 = vmatpush.bf16.msra.mxu0 %v472
        %495 = vmatmul.bf16.gmra.mxu0 %v466
        %v496 = vpop.f32.mrf.mxu0
        %v497 = vadd.f32 0.0, %v496
        %v498 = vpop.f32.mrf.mxu0
        %499 = vdwg.mxu0
        %v500 = vadd.f32 %v403, %v484
        %v501 = vadd.f32 %v416, %v497
        %v502 = vld [vmem:[#allocation2] sm:$0x3f]
        %v503 = vunpack.c.l.bf16 %v502
        %v504 = vunpack.c.h.bf16 %v502
        %505 = vrot.lane.b32.xlu0 %v316, 16
        %v506 = vpop.permute.xlu0 %505
        %v507 = vrot.slane %v506, 4
        %vm508 = vcmask 130048
        %v509 = vsel %vm508, %v507, %v506
        %v512 = vmul.f32 %v503, %v509
        %v513 = vmul.f32 %v504, %v507
        %516 = vst [vmem:[#allocation1] ss:$2 sm:$0xff] %v512
        %s517 = scalar_lea.vmem [#allocation1], 16
        %518 = vst [vmem:[%s517] ss:$2 sm:$0xff] %v513
        %v519 = vld.sshfl [vmem:[#allocation1] sm:$0xff pattern:$0x75316420]
        %v520 = vld.sshfl [vmem:[#allocation1 + $0x8] sm:$0xff pattern:$0x75316420]
        %v521 = vld.sshfl [vmem:[#allocation1 + $0x10] sm:$0xff pattern:$0x75316420]
        %v525 = vpack.c.bf16 %v519, %v519
        %v526 = vpack.c.bf16 %v520, %v520
        %v527 = vpack.c.bf16 %v521, %v521
        %s528 = scalar_lea.vmem %s1, 12
        %v529 = vld [vmem:[%s528] sm:$0xf]
        %533 = vrot.lane.b32.xlu0 %v525, 112
        %v534 = vpop.permute.xlu0 %533
        %535 = vrot.lane.b32.xlu0 %v526, 112
        %v536 = vpop.permute.xlu0 %535
        %537 = vrot.lane.b32.xlu0 %v527, 112
        %v538 = vpop.permute.xlu0 %537
        %vm539 = vcmask 916480
        %v540 = vsel %vm539, %v534, %v536
        %v541 = vsel %vm539, %v536, %v538
        %v543 = vsel %vm348, %v529, 0
        %v546 = vsel %vm291, %v540, 0
        %v549 = vsel %vm291, %v541, 0
        %551 = vmatpush.bf16.msra.mxu0 0
        %552 = vmatpush.bf16.msra.mxu0 0
        %553 = vmatpush.bf16.msra.mxu0 0
        %554 = vmatpush.bf16.msra.mxu0 0
        %555 = vmatpush.bf16.msra.mxu0 0
        %556 = vmatpush.bf16.msra.mxu0 0
        %557 = vmatpush.bf16.msra.mxu0 0
        %558 = vmatpush.bf16.msra.mxu0 %v546
        %559 = vmatmul.bf16.gmra.mxu0 %v543
        %v560 = vpop.f32.mrf.mxu0
        %v561 = vadd.f32 0.0, %v560
        %v562 = vpop.f32.mrf.mxu0
        %563 = vdwg.mxu0
        %564 = vmatpush.bf16.msra.mxu0 0
        %565 = vmatpush.bf16.msra.mxu0 0
        %566 = vmatpush.bf16.msra.mxu0 0
        %567 = vmatpush.bf16.msra.mxu0 0
        %568 = vmatpush.bf16.msra.mxu0 0
        %569 = vmatpush.bf16.msra.mxu0 0
        %570 = vmatpush.bf16.msra.mxu0 0
        %571 = vmatpush.bf16.msra.mxu0 %v549
        %572 = vmatmul.bf16.gmra.mxu0 %v543
        %v573 = vpop.f32.mrf.mxu0
        %v574 = vadd.f32 0.0, %v573
        %v575 = vpop.f32.mrf.mxu0
        %576 = vdwg.mxu0
        %v577 = vadd.f32 %v500, %v561
        %v578 = vadd.f32 %v501, %v574
        %v579 = vld [vmem:[#allocation2] sm:$0x3f]
        %s580 = scalar_lea.vmem %s1, 16
        %v581 = vld [vmem:[%s580] sm:$0xf]
        %583 = vst [vmem:[#allocation1] ss:$4 sm:$0xff] %v579
        %v584 = vld.sshfl [vmem:[#allocation1] sm:$0xff pattern:$0x73625140]
        %v586 = vld.sshfl [vmem:[#allocation1 + $0x8] sm:$0xff pattern:$0x73625140]
        %v588 = vld.sshfl [vmem:[#allocation1 + $0x10] sm:$0xff pattern:$0x73625140]
        %590 = vrot.lane.b32.xlu0 %v584, 111
        %v591 = vpop.permute.xlu0 %590
        %592 = vrot.lane.b32.xlu0 %v586, 111
        %v593 = vpop.permute.xlu0 %592
        %594 = vrot.lane.b32.xlu0 %v588, 111
        %v595 = vpop.permute.xlu0 %594
        %vm596 = vcmask 908288
        %v597 = vsel %vm596, %v591, %v593
        %v598 = vsel %vm596, %v593, %v595
        %v600 = vsel %vm348, %v581, 0
        %v603 = vsel %vm291, %v597, 0
        %v606 = vsel %vm291, %v598, 0
        %608 = vmatpush.bf16.msra.mxu0 0
        %609 = vmatpush.bf16.msra.mxu0 0
        %610 = vmatpush.bf16.msra.mxu0 0
        %611 = vmatpush.bf16.msra.mxu0 0
        %612 = vmatpush.bf16.msra.mxu0 0
        %613 = vmatpush.bf16.msra.mxu0 0
        %614 = vmatpush.bf16.msra.mxu0 0
        %615 = vmatpush.bf16.msra.mxu0 %v603
        %616 = vmatmul.bf16.gmra.mxu0 %v600
        %v617 = vpop.f32.mrf.mxu0
        %v618 = vadd.f32 0.0, %v617
        %v619 = vpop.f32.mrf.mxu0
        %620 = vdwg.mxu0
        %621 = vmatpush.bf16.msra.mxu0 0
        %622 = vmatpush.bf16.msra.mxu0 0
        %623 = vmatpush.bf16.msra.mxu0 0
        %624 = vmatpush.bf16.msra.mxu0 0
        %625 = vmatpush.bf16.msra.mxu0 0
        %626 = vmatpush.bf16.msra.mxu0 0
        %627 = vmatpush.bf16.msra.mxu0 0
        %628 = vmatpush.bf16.msra.mxu0 %v606
        %629 = vmatmul.bf16.gmra.mxu0 %v600
        %v630 = vpop.f32.mrf.mxu0
        %v631 = vadd.f32 0.0, %v630
        %v632 = vpop.f32.mrf.mxu0
        %633 = vdwg.mxu0
        %v634 = vadd.f32 %v577, %v618
        %v635 = vadd.f32 %v578, %v631
        %v636 = vld [vmem:[#allocation2] sm:$0x3f]
        %v637 = vunpack.c.l.bf16 %v636
        %v638 = vunpack.c.h.bf16 %v636
        %639 = vrot.lane.b32.xlu0 %v427, 18
        %v640 = vpop.permute.xlu0 %639
        %v641 = vrot.slane %v640, 4
        %vm642 = vcmask 146432
        %v643 = vsel %vm642, %v641, %v640
        %v646 = vmul.f32 %v637, %v643
        %v647 = vmul.f32 %v638, %v641
        %650 = vst [vmem:[#allocation1] ss:$2 sm:$0xff] %v646
        %s651 = scalar_lea.vmem [#allocation1], 16
        %652 = vst [vmem:[%s651] ss:$2 sm:$0xff] %v647
        %v653 = vld.sshfl [vmem:[#allocation1] sm:$0xff pattern:$0x75316420]
        %v654 = vld.sshfl [vmem:[#allocation1 + $0x8] sm:$0xff pattern:$0x75316420]
        %v655 = vld.sshfl [vmem:[#allocation1 + $0x10] sm:$0xff pattern:$0x75316420]
        %v659 = vpack.c.bf16 %v653, %v653
        %v660 = vpack.c.bf16 %v654, %v654
        %v661 = vpack.c.bf16 %v655, %v655
        %s662 = scalar_lea.vmem %s1, 20
        %v663 = vld [vmem:[%s662] sm:$0xf]
        %667 = vrot.lane.b32.xlu0 %v659, 110
        %v668 = vpop.permute.xlu0 %667
        %669 = vrot.lane.b32.xlu0 %v660, 110
        %v670 = vpop.permute.xlu0 %669
        %671 = vrot.lane.b32.xlu0 %v661, 110
        %v672 = vpop.permute.xlu0 %671
        %vm673 = vcmask 900096
        %v674 = vsel %vm673, %v668, %v670
        %v675 = vsel %vm673, %v670, %v672
        %v677 = vsel %vm348, %v663, 0
        %v680 = vsel %vm291, %v674, 0
        %v683 = vsel %vm291, %v675, 0
        %685 = vmatpush.bf16.msra.mxu0 0
        %686 = vmatpush.bf16.msra.mxu0 0
        %687 = vmatpush.bf16.msra.mxu0 0
        %688 = vmatpush.bf16.msra.mxu0 0
        %689 = vmatpush.bf16.msra.mxu0 0
        %690 = vmatpush.bf16.msra.mxu0 0
        %691 = vmatpush.bf16.msra.mxu0 0
        %692 = vmatpush.bf16.msra.mxu0 %v680
        %693 = vmatmul.bf16.gmra.mxu0 %v677
        %v694 = vpop.f32.mrf.mxu0
        %v695 = vadd.f32 0.0, %v694
        %v696 = vpop.f32.mrf.mxu0
        %697 = vdwg.mxu0
        %698 = vmatpush.bf16.msra.mxu0 0
        %699 = vmatpush.bf16.msra.mxu0 0
        %700 = vmatpush.bf16.msra.mxu0 0
        %701 = vmatpush.bf16.msra.mxu0 0
        %702 = vmatpush.bf16.msra.mxu0 0
        %703 = vmatpush.bf16.msra.mxu0 0
        %704 = vmatpush.bf16.msra.mxu0 0
        %705 = vmatpush.bf16.msra.mxu0 %v683
        %706 = vmatmul.bf16.gmra.mxu0 %v677
        %v707 = vpop.f32.mrf.mxu0
        %v708 = vadd.f32 0.0, %v707
        %v709 = vpop.f32.mrf.mxu0
        %710 = vdwg.mxu0
        %v711 = vadd.f32 %v634, %v695
        %v712 = vadd.f32 %v635, %v708
        %v713 = vld [vmem:[#allocation2] sm:$0x3f]
        %v714 = vunpack.c.l.bf16 %v713
        %v715 = vunpack.c.h.bf16 %v713
        %716 = vrot.lane.b32.xlu0 %v316, 32
        %v717 = vpop.permute.xlu0 %716
        %v718 = vrot.slane %v717, 4
        %vm719 = vcmask 261120
        %v720 = vsel %vm719, %v718, %v717
        %v723 = vmul.f32 %v714, %v720
        %v724 = vmul.f32 %v715, %v718
        %727 = vst [vmem:[#allocation1] ss:$2 sm:$0xff] %v723
        %s728 = scalar_lea.vmem [#allocation1], 16
        %729 = vst [vmem:[%s728] ss:$2 sm:$0xff] %v724
        %v730 = vld.sshfl [vmem:[#allocation1] sm:$0xff pattern:$0x75316420]
        %v731 = vld.sshfl [vmem:[#allocation1 + $0x8] sm:$0xff pattern:$0x75316420]
        %v732 = vld.sshfl [vmem:[#allocation1 + $0x10] sm:$0xff pattern:$0x75316420]
        %v736 = vpack.c.bf16 %v730, %v730
        %v737 = vpack.c.bf16 %v731, %v731
        %v738 = vpack.c.bf16 %v732, %v732
        %s739 = scalar_lea.vmem %s1, 24
        %v740 = vld [vmem:[%s739] sm:$0xf]
        %744 = vrot.lane.b32.xlu0 %v736, 96
        %v745 = vpop.permute.xlu0 %744
        %746 = vrot.lane.b32.xlu0 %v737, 96
        %v747 = vpop.permute.xlu0 %746
        %748 = vrot.lane.b32.xlu0 %v738, 96
        %v749 = vpop.permute.xlu0 %748
        %vm750 = vcmask 785408
        %v751 = vsel %vm750, %v745, %v747
        %v752 = vsel %vm750, %v747, %v749
        %v754 = vsel %vm348, %v740, 0
        %v757 = vsel %vm291, %v751, 0
        %v760 = vsel %vm291, %v752, 0
        %762 = vmatpush.bf16.msra.mxu0 0
        %763 = vmatpush.bf16.msra.mxu0 0
        %764 = vmatpush.bf16.msra.mxu0 0
        %765 = vmatpush.bf16.msra.mxu0 0
        %766 = vmatpush.bf16.msra.mxu0 0
        %767 = vmatpush.bf16.msra.mxu0 0
        %768 = vmatpush.bf16.msra.mxu0 0
        %769 = vmatpush.bf16.msra.mxu0 %v757
        %770 = vmatmul.bf16.gmra.mxu0 %v754
        %v771 = vpop.f32.mrf.mxu0
        %v772 = vadd.f32 0.0, %v771
        %v773 = vpop.f32.mrf.mxu0
        %774 = vdwg.mxu0
        %775 = vmatpush.bf16.msra.mxu0 0
        %776 = vmatpush.bf16.msra.mxu0 0
        %777 = vmatpush.bf16.msra.mxu0 0
        %778 = vmatpush.bf16.msra.mxu0 0
        %779 = vmatpush.bf16.msra.mxu0 0
        %780 = vmatpush.bf16.msra.mxu0 0
        %781 = vmatpush.bf16.msra.mxu0 0
        %782 = vmatpush.bf16.msra.mxu0 %v760
        %783 = vmatmul.bf16.gmra.mxu0 %v754
        %v784 = vpop.f32.mrf.mxu0
        %v785 = vadd.f32 0.0, %v784
        %v786 = vpop.f32.mrf.mxu0
        %787 = vdwg.mxu0
        %v788 = vadd.f32 %v711, %v772
        %v789 = vadd.f32 %v712, %v785
        %v790 = vld [vmem:[#allocation2] sm:$0x3f]
        %s791 = scalar_lea.vmem %s1, 28
        %v792 = vld [vmem:[%s791] sm:$0xf]
        %794 = vst [vmem:[#allocation1] ss:$4 sm:$0xff] %v790
        %v795 = vld.sshfl [vmem:[#allocation1] sm:$0xff pattern:$0x73625140]
        %v797 = vld.sshfl [vmem:[#allocation1 + $0x8] sm:$0xff pattern:$0x73625140]
        %v799 = vld.sshfl [vmem:[#allocation1 + $0x10] sm:$0xff pattern:$0x73625140]
        %801 = vrot.lane.b32.xlu0 %v795, 95
        %v802 = vpop.permute.xlu0 %801
        %803 = vrot.lane.b32.xlu0 %v797, 95
        %v804 = vpop.permute.xlu0 %803
        %805 = vrot.lane.b32.xlu0 %v799, 95
        %v806 = vpop.permute.xlu0 %805
        %vm807 = vcmask 777216
        %v808 = vsel %vm807, %v802, %v804
        %v809 = vsel %vm807, %v804, %v806
        %v811 = vsel %vm348, %v792, 0
        %v814 = vsel %vm291, %v808, 0
        %v817 = vsel %vm291, %v809, 0
        %819 = vmatpush.bf16.msra.mxu0 0
        %820 = vmatpush.bf16.msra.mxu0 0
        %821 = vmatpush.bf16.msra.mxu0 0
        %822 = vmatpush.bf16.msra.mxu0 0
        %823 = vmatpush.bf16.msra.mxu0 0
        %824 = vmatpush.bf16.msra.mxu0 0
        %825 = vmatpush.bf16.msra.mxu0 0
        %826 = vmatpush.bf16.msra.mxu0 %v814
        %827 = vmatmul.bf16.gmra.mxu0 %v811
        %v828 = vpop.f32.mrf.mxu0
        %v829 = vadd.f32 0.0, %v828
        %v830 = vpop.f32.mrf.mxu0
        %831 = vdwg.mxu0
        %832 = vmatpush.bf16.msra.mxu0 0
        %833 = vmatpush.bf16.msra.mxu0 0
        %834 = vmatpush.bf16.msra.mxu0 0
        %835 = vmatpush.bf16.msra.mxu0 0
        %836 = vmatpush.bf16.msra.mxu0 0
        %837 = vmatpush.bf16.msra.mxu0 0
        %838 = vmatpush.bf16.msra.mxu0 0
        %839 = vmatpush.bf16.msra.mxu0 %v817
        %840 = vmatmul.bf16.gmra.mxu0 %v811
        %v841 = vpop.f32.mrf.mxu0
        %v842 = vadd.f32 0.0, %v841
        %v843 = vpop.f32.mrf.mxu0
        %844 = vdwg.mxu0
        %v845 = vadd.f32 %v788, %v829
        %v846 = vadd.f32 %v789, %v842
        %v847 = vld [vmem:[#allocation2] sm:$0x3f]
        %v848 = vunpack.c.l.bf16 %v847
        %v849 = vunpack.c.h.bf16 %v847
        %850 = vrot.lane.b32.xlu0 %v427, 34
        %v851 = vpop.permute.xlu0 %850
        %v852 = vrot.slane %v851, 4
        %vm853 = vcmask 277504
        %v854 = vsel %vm853, %v852, %v851
        %v857 = vmul.f32 %v848, %v854
        %v858 = vmul.f32 %v849, %v852
        %861 = vst [vmem:[#allocation1] ss:$2 sm:$0xff] %v857
        %s862 = scalar_lea.vmem [#allocation1], 16
        %863 = vst [vmem:[%s862] ss:$2 sm:$0xff] %v858
        %v864 = vld.sshfl [vmem:[#allocation1] sm:$0xff pattern:$0x75316420]
        %v865 = vld.sshfl [vmem:[#allocation1 + $0x8] sm:$0xff pattern:$0x75316420]
        %v866 = vld.sshfl [vmem:[#allocation1 + $0x10] sm:$0xff pattern:$0x75316420]
        %v870 = vpack.c.bf16 %v864, %v864
        %v871 = vpack.c.bf16 %v865, %v865
        %v872 = vpack.c.bf16 %v866, %v866
        %s873 = scalar_lea.vmem %s1, 32
        %v874 = vld [vmem:[%s873] sm:$0xf]
        %878 = vrot.lane.b32.xlu0 %v870, 94
        %v879 = vpop.permute.xlu0 %878
        %880 = vrot.lane.b32.xlu0 %v871, 94
        %v881 = vpop.permute.xlu0 %880
        %882 = vrot.lane.b32.xlu0 %v872, 94
        %v883 = vpop.permute.xlu0 %882
        %vm884 = vcmask 769024
        %v885 = vsel %vm884, %v879, %v881
        %v886 = vsel %vm884, %v881, %v883
        %v888 = vsel %vm348, %v874, 0
        %v891 = vsel %vm291, %v885, 0
        %v894 = vsel %vm291, %v886, 0
        %896 = vmatpush.bf16.msra.mxu0 0
        %897 = vmatpush.bf16.msra.mxu0 0
        %898 = vmatpush.bf16.msra.mxu0 0
        %899 = vmatpush.bf16.msra.mxu0 0
        %900 = vmatpush.bf16.msra.mxu0 0
        %901 = vmatpush.bf16.msra.mxu0 0
        %902 = vmatpush.bf16.msra.mxu0 0
        %903 = vmatpush.bf16.msra.mxu0 %v891
        %904 = vmatmul.bf16.gmra.mxu0 %v888
        %v905 = vpop.f32.mrf.mxu0
        %v906 = vadd.f32 0.0, %v905
        %v907 = vpop.f32.mrf.mxu0
        %908 = vdwg.mxu0
        %909 = vmatpush.bf16.msra.mxu0 0
        %910 = vmatpush.bf16.msra.mxu0 0
        %911 = vmatpush.bf16.msra.mxu0 0
        %912 = vmatpush.bf16.msra.mxu0 0
        %913 = vmatpush.bf16.msra.mxu0 0
        %914 = vmatpush.bf16.msra.mxu0 0
        %915 = vmatpush.bf16.msra.mxu0 0
        %916 = vmatpush.bf16.msra.mxu0 %v894
        %917 = vmatmul.bf16.gmra.mxu0 %v888
        %v918 = vpop.f32.mrf.mxu0
        %v919 = vadd.f32 0.0, %v918
        %v920 = vpop.f32.mrf.mxu0
        %921 = vdwg.mxu0
        %v922 = vadd.f32 %v845, %v906
        %v923 = vadd.f32 %v846, %v919
        %v924 = vadd.f32 %v922, %v923
        %925 = vadd.xlane.f32.xlu0 %v924
        %v926 = vpop.xlane.xlu0 %925
        %v927 = vmul.f32 %v926, 0.00390625
        %v928 = vmul.f32 %v922, %v922
        %v929 = vmul.f32 %v923, %v923
        %v930 = vadd.f32 %v928, %v929
        %931 = vadd.xlane.f32.xlu0 %v930
        %v932 = vpop.xlane.xlu0 %931
        %v933 = vmul.f32 %v932, 0.00390625
        %v934 = vmul.f32 %v927, %v927
        %v935 = vsub.f32 %v933, %v934
        %v936 = vmax.f32 %v935, 0.0
        %v937 = vld [vmem:[%s2] sm:$0xff]
        %v938 = vadd.f32 %v936, 1e-05
        %v939 = vrsqrt.pop %v938
        %v940 = vmul.f32 %v939, %v938
        %v941 = vmul.f32 %v940, %v939
        %v942 = vmul.f32 0.5, %v941
        %v943 = vsub.f32 1.5, %v942
        %v944 = vmul.f32 %v939, %v943
        %vm945 = vweird.f32 %v938
        %vm946 = vweird.f32 %v939
        %vm947 = vmor %vm945, %vm946
        %v948 = vsel %vm947, %v939, %v944
        %v949 = vmul.f32 %v937, %v948
        %v950 = vmul.f32 %v927, %v949
        %952 = vrot.lane.b32.xlu0 %v950, 1
        %v953 = vpop.permute.xlu0 %952
        %v955 = vsub.f32 %v937, %v953
        %957 = vset.pattern.permute.xlu0 0
        %958 = vperm.xlu0 %957, %v949
        %v959 = vpop.permute.xlu0 %958
        %v961 = vmul.f32 %v922, %v959
        %v962 = vmul.f32 %v923, %v959
        %964 = vset.pattern.permute.xlu0 1
        %965 = vperm.xlu0 %964, %v955
        %v966 = vpop.permute.xlu0 %965
        %v968 = vadd.f32 %v961, %v966
        %v969 = vadd.f32 %v962, %v966
        %v970 = vmul.f32 %v968, 0.01
        %v971 = vmul.f32 %v969, 0.01
        %v972 = vmax.f32 %v968, %v970
        %v973 = vmax.f32 %v969, %v971
        %v974 = vpack.c.bf16 %v973, %v972
        %976 = vrot.lane.b32.xlu0 %v974, 17
        %v977 = vpop.permute.xlu0 %976
        %v978 = vrot.slane %v977, 4
        %v979 = vsel %vm299, %v978, %v977
        %vm982 = vcmask 1043592
        %vm983 = vcmask 1047556
        %vm984 = vmor %vm983, %vm982
        %985 = vst.msk [vmem:[#allocation3] sm:$0xff] %vm984, %v979
        %986 = vst.msk [vmem:[#allocation3 + $0x8] sm:$0xf] %vm277, %v978
        %v987 = vld [vmem:[#allocation3] sm:$0xff]
        %v988 = vunpack.c.l.bf16 %v987
        %v989 = vunpack.c.h.bf16 %v987
        %v990 = vmul.f32 %v988, %v310
        %v991 = vmul.f32 %v989, %v311
        %v992 = vpack.c.bf16 %v990, %v990
        %v993 = vpack.c.bf16 %v991, %v991
        %v994 = vld [vmem:[%s3] sm:$0xf]
        %v995 = vld [vmem:[#allocation3 + $0x8] sm:$0xf]
        %s996 = scalar_lea.vmem %s3, 4
        %v997 = vld [vmem:[%s996] sm:$0xf]
        %v1000 = vunpack.c.l.b16 %v987
        %v1001 = vunpack.c.h.b16 %v987
        %v1002 = vunpack.c.l.b16 %v995
        %v1003 = vpack.c.b16 %v1000, %v1000
        %v1004 = vpack.c.b16 %v1001, %v1001
        %v1005 = vpack.c.b16 %v1002, %v1002
        %1006 = vrot.lane.b32.xlu0 %v1003, 127
        %v1007 = vpop.permute.xlu0 %1006
        %1008 = vrot.lane.b32.xlu0 %v1004, 127
        %v1009 = vpop.permute.xlu0 %1008
        %1010 = vrot.lane.b32.xlu0 %v1005, 127
        %v1011 = vpop.permute.xlu0 %1010
        %v1012 = vsel %vm345, %v1007, %v1009
        %v1013 = vsel %vm345, %v1009, %v1011
        %vm1014 = vcmask 64512
        %v1016 = vsel %vm1014, %v997, 0
        %v1019 = vsel %vm315, %v1012, 0
        %v1022 = vsel %vm315, %v1013, 0
        %1024 = vmatpush.bf16.msra.mxu0 0
        %1025 = vmatpush.bf16.msra.mxu0 0
        %1026 = vmatpush.bf16.msra.mxu0 0
        %1027 = vmatpush.bf16.msra.mxu0 0
        %1028 = vmatpush.bf16.msra.mxu0 0
        %1029 = vmatpush.bf16.msra.mxu0 0
        %1030 = vmatpush.bf16.msra.mxu0 0
        %1031 = vmatpush.bf16.msra.mxu0 %v1019
        %1032 = vmatmul.bf16.gmra.mxu0 %v1016
        %v1033 = vpop.f32.mrf.mxu0
        %v1034 = vadd.f32 0.0, %v1033
        %v1035 = vpop.f32.mrf.mxu0
        %1036 = vdwg.mxu0
        %1037 = vmatpush.bf16.msra.mxu0 0
        %1038 = vmatpush.bf16.msra.mxu0 0
        %1039 = vmatpush.bf16.msra.mxu0 0
        %1040 = vmatpush.bf16.msra.mxu0 0
        %1041 = vmatpush.bf16.msra.mxu0 0
        %1042 = vmatpush.bf16.msra.mxu0 0
        %1043 = vmatpush.bf16.msra.mxu0 0
        %1044 = vmatpush.bf16.msra.mxu0 %v1022
        %1045 = vmatmul.bf16.gmra.mxu0 %v1016
        %v1046 = vpop.f32.mrf.mxu0
        %v1047 = vadd.f32 0.0, %v1046
        %v1048 = vpop.f32.mrf.mxu0
        %1049 = vdwg.mxu0
        %v1051 = vsel %vm1014, %v994, 0
        %v1054 = vsel %vm315, %v992, 0
        %v1057 = vsel %vm315, %v993, 0
        %1059 = vmatpush.bf16.msra.mxu0 0
        %1060 = vmatpush.bf16.msra.mxu0 0
        %1061 = vmatpush.bf16.msra.mxu0 0
        %1062 = vmatpush.bf16.msra.mxu0 0
        %1063 = vmatpush.bf16.msra.mxu0 0
        %1064 = vmatpush.bf16.msra.mxu0 0
        %1065 = vmatpush.bf16.msra.mxu0 0
        %1066 = vmatpush.bf16.msra.mxu0 %v1054
        %1067 = vmatmul.bf16.gmra.mxu0 %v1051
        %v1068 = vpop.f32.mrf.mxu0
        %v1069 = vadd.f32 %v1034, %v1068
        %v1070 = vpop.f32.mrf.mxu0
        %1071 = vdwg.mxu0
        %1072 = vmatpush.bf16.msra.mxu0 0
        %1073 = vmatpush.bf16.msra.mxu0 0
        %1074 = vmatpush.bf16.msra.mxu0 0
        %1075 = vmatpush.bf16.msra.mxu0 0
        %1076 = vmatpush.bf16.msra.mxu0 0
        %1077 = vmatpush.bf16.msra.mxu0 0
        %1078 = vmatpush.bf16.msra.mxu0 0
        %1079 = vmatpush.bf16.msra.mxu0 %v1057
        %1080 = vmatmul.bf16.gmra.mxu0 %v1051
        %v1081 = vpop.f32.mrf.mxu0
        %v1082 = vadd.f32 %v1047, %v1081
        %v1083 = vpop.f32.mrf.mxu0
        %1084 = vdwg.mxu0
        %v1085 = vunpack.c.l.bf16 %v995
        %1086 = vrot.lane.b32.xlu0 %v422, 2
        %v1087 = vpop.permute.xlu0 %1086
        %1088 = vrot.lane.b32.xlu0 %v423, 2
        %v1089 = vpop.permute.xlu0 %1088
        %v1090 = vsel %vm431, %v1087, %v1089
        %v1094 = vmul.f32 %v988, %v1087
        %v1095 = vmul.f32 %v989, %v1090
        %v1096 = vmul.f32 %v1085, %v1089
        %v1097 = vpack.c.bf16 %v1094, %v1094
        %v1098 = vpack.c.bf16 %v1095, %v1095
        %v1099 = vpack.c.bf16 %v1096, %v1096
        %s1100 = scalar_lea.vmem %s3, 8
        %v1101 = vld [vmem:[%s1100] sm:$0xf]
        %1105 = vrot.lane.b32.xlu0 %v1097, 126
        %v1106 = vpop.permute.xlu0 %1105
        %1107 = vrot.lane.b32.xlu0 %v1098, 126
        %v1108 = vpop.permute.xlu0 %1107
        %1109 = vrot.lane.b32.xlu0 %v1099, 126
        %v1110 = vpop.permute.xlu0 %1109
        %v1111 = vsel %vm462, %v1106, %v1108
        %v1112 = vsel %vm462, %v1108, %v1110
        %v1114 = vsel %vm1014, %v1101, 0
        %v1117 = vsel %vm315, %v1111, 0
        %v1120 = vsel %vm315, %v1112, 0
        %1122 = vmatpush.bf16.msra.mxu0 0
        %1123 = vmatpush.bf16.msra.mxu0 0
        %1124 = vmatpush.bf16.msra.mxu0 0
        %1125 = vmatpush.bf16.msra.mxu0 0
        %1126 = vmatpush.bf16.msra.mxu0 0
        %1127 = vmatpush.bf16.msra.mxu0 0
        %1128 = vmatpush.bf16.msra.mxu0 0
        %1129 = vmatpush.bf16.msra.mxu0 %v1117
        %1130 = vmatmul.bf16.gmra.mxu0 %v1114
        %v1131 = vpop.f32.mrf.mxu0
        %v1132 = vadd.f32 0.0, %v1131
        %v1133 = vpop.f32.mrf.mxu0
        %1134 = vdwg.mxu0
        %1135 = vmatpush.bf16.msra.mxu0 0
        %1136 = vmatpush.bf16.msra.mxu0 0
        %1137 = vmatpush.bf16.msra.mxu0 0
        %1138 = vmatpush.bf16.msra.mxu0 0
        %1139 = vmatpush.bf16.msra.mxu0 0
        %1140 = vmatpush.bf16.msra.mxu0 0
        %1141 = vmatpush.bf16.msra.mxu0 0
        %1142 = vmatpush.bf16.msra.mxu0 %v1120
        %1143 = vmatmul.bf16.gmra.mxu0 %v1114
        %v1144 = vpop.f32.mrf.mxu0
        %v1145 = vadd.f32 0.0, %v1144
        %v1146 = vpop.f32.mrf.mxu0
        %1147 = vdwg.mxu0
        %v1148 = vadd.f32 %v1069, %v1132
        %v1149 = vadd.f32 %v1082, %v1145
        %1150 = vrot.lane.b32.xlu0 %v310, 16
        %v1151 = vpop.permute.xlu0 %1150
        %1152 = vrot.lane.b32.xlu0 %v311, 16
        %v1153 = vpop.permute.xlu0 %1152
        %v1154 = vsel %vm508, %v1151, %v1153
        %v1158 = vmul.f32 %v988, %v1151
        %v1159 = vmul.f32 %v989, %v1154
        %v1160 = vmul.f32 %v1085, %v1153
        %v1161 = vpack.c.bf16 %v1158, %v1158
        %v1162 = vpack.c.bf16 %v1159, %v1159
        %v1163 = vpack.c.bf16 %v1160, %v1160
        %s1164 = scalar_lea.vmem %s3, 12
        %v1165 = vld [vmem:[%s1164] sm:$0xf]
        %1169 = vrot.lane.b32.xlu0 %v1161, 112
        %v1170 = vpop.permute.xlu0 %1169
        %1171 = vrot.lane.b32.xlu0 %v1162, 112
        %v1172 = vpop.permute.xlu0 %1171
        %1173 = vrot.lane.b32.xlu0 %v1163, 112
        %v1174 = vpop.permute.xlu0 %1173
        %v1175 = vsel %vm539, %v1170, %v1172
        %v1176 = vsel %vm539, %v1172, %v1174
        %v1178 = vsel %vm1014, %v1165, 0
        %v1181 = vsel %vm315, %v1175, 0
        %v1184 = vsel %vm315, %v1176, 0
        %1186 = vmatpush.bf16.msra.mxu0 0
        %1187 = vmatpush.bf16.msra.mxu0 0
        %1188 = vmatpush.bf16.msra.mxu0 0
        %1189 = vmatpush.bf16.msra.mxu0 0
        %1190 = vmatpush.bf16.msra.mxu0 0
        %1191 = vmatpush.bf16.msra.mxu0 0
        %1192 = vmatpush.bf16.msra.mxu0 0
        %1193 = vmatpush.bf16.msra.mxu0 %v1181
        %1194 = vmatmul.bf16.gmra.mxu0 %v1178
        %v1195 = vpop.f32.mrf.mxu0
        %v1196 = vadd.f32 0.0, %v1195
        %v1197 = vpop.f32.mrf.mxu0
        %1198 = vdwg.mxu0
        %1199 = vmatpush.bf16.msra.mxu0 0
        %1200 = vmatpush.bf16.msra.mxu0 0
        %1201 = vmatpush.bf16.msra.mxu0 0
        %1202 = vmatpush.bf16.msra.mxu0 0
        %1203 = vmatpush.bf16.msra.mxu0 0
        %1204 = vmatpush.bf16.msra.mxu0 0
        %1205 = vmatpush.bf16.msra.mxu0 0
        %1206 = vmatpush.bf16.msra.mxu0 %v1184
        %1207 = vmatmul.bf16.gmra.mxu0 %v1178
        %v1208 = vpop.f32.mrf.mxu0
        %v1209 = vadd.f32 0.0, %v1208
        %v1210 = vpop.f32.mrf.mxu0
        %1211 = vdwg.mxu0
        %v1212 = vadd.f32 %v1148, %v1196
        %v1213 = vadd.f32 %v1149, %v1209
        %s1214 = scalar_lea.vmem %s3, 16
        %v1215 = vld [vmem:[%s1214] sm:$0xf]
        %1216 = vrot.lane.b32.xlu0 %v1003, 111
        %v1217 = vpop.permute.xlu0 %1216
        %1218 = vrot.lane.b32.xlu0 %v1004, 111
        %v1219 = vpop.permute.xlu0 %1218
        %1220 = vrot.lane.b32.xlu0 %v1005, 111
        %v1221 = vpop.permute.xlu0 %1220
        %v1222 = vsel %vm596, %v1217, %v1219
        %v1223 = vsel %vm596, %v1219, %v1221
        %v1225 = vsel %vm1014, %v1215, 0
        %v1228 = vsel %vm315, %v1222, 0
        %v1231 = vsel %vm315, %v1223, 0
        %1233 = vmatpush.bf16.msra.mxu0 0
        %1234 = vmatpush.bf16.msra.mxu0 0
        %1235 = vmatpush.bf16.msra.mxu0 0
        %1236 = vmatpush.bf16.msra.mxu0 0
        %1237 = vmatpush.bf16.msra.mxu0 0
        %1238 = vmatpush.bf16.msra.mxu0 0
        %1239 = vmatpush.bf16.msra.mxu0 0
        %1240 = vmatpush.bf16.msra.mxu0 %v1228
        %1241 = vmatmul.bf16.gmra.mxu0 %v1225
        %v1242 = vpop.f32.mrf.mxu0
        %v1243 = vadd.f32 0.0, %v1242
        %v1244 = vpop.f32.mrf.mxu0
        %1245 = vdwg.mxu0
        %1246 = vmatpush.bf16.msra.mxu0 0
        %1247 = vmatpush.bf16.msra.mxu0 0
        %1248 = vmatpush.bf16.msra.mxu0 0
        %1249 = vmatpush.bf16.msra.mxu0 0
        %1250 = vmatpush.bf16.msra.mxu0 0
        %1251 = vmatpush.bf16.msra.mxu0 0
        %1252 = vmatpush.bf16.msra.mxu0 0
        %1253 = vmatpush.bf16.msra.mxu0 %v1231
        %1254 = vmatmul.bf16.gmra.mxu0 %v1225
        %v1255 = vpop.f32.mrf.mxu0
        %v1256 = vadd.f32 0.0, %v1255
        %v1257 = vpop.f32.mrf.mxu0
        %1258 = vdwg.mxu0
        %v1259 = vadd.f32 %v1212, %v1243
        %v1260 = vadd.f32 %v1213, %v1256
        %1261 = vrot.lane.b32.xlu0 %v422, 18
        %v1262 = vpop.permute.xlu0 %1261
        %1263 = vrot.lane.b32.xlu0 %v423, 18
        %v1264 = vpop.permute.xlu0 %1263
        %v1265 = vsel %vm642, %v1262, %v1264
        %v1269 = vmul.f32 %v988, %v1262
        %v1270 = vmul.f32 %v989, %v1265
        %v1271 = vmul.f32 %v1085, %v1264
        %v1272 = vpack.c.bf16 %v1269, %v1269
        %v1273 = vpack.c.bf16 %v1270, %v1270
        %v1274 = vpack.c.bf16 %v1271, %v1271
        %s1275 = scalar_lea.vmem %s3, 20
        %v1276 = vld [vmem:[%s1275] sm:$0xf]
        %1280 = vrot.lane.b32.xlu0 %v1272, 110
        %v1281 = vpop.permute.xlu0 %1280
        %1282 = vrot.lane.b32.xlu0 %v1273, 110
        %v1283 = vpop.permute.xlu0 %1282
        %1284 = vrot.lane.b32.xlu0 %v1274, 110
        %v1285 = vpop.permute.xlu0 %1284
        %v1286 = vsel %vm673, %v1281, %v1283
        %v1287 = vsel %vm673, %v1283, %v1285
        %v1289 = vsel %vm1014, %v1276, 0
        %v1292 = vsel %vm315, %v1286, 0
        %v1295 = vsel %vm315, %v1287, 0
        %1297 = vmatpush.bf16.msra.mxu0 0
        %1298 = vmatpush.bf16.msra.mxu0 0
        %1299 = vmatpush.bf16.msra.mxu0 0
        %1300 = vmatpush.bf16.msra.mxu0 0
        %1301 = vmatpush.bf16.msra.mxu0 0
        %1302 = vmatpush.bf16.msra.mxu0 0
        %1303 = vmatpush.bf16.msra.mxu0 0
        %1304 = vmatpush.bf16.msra.mxu0 %v1292
        %1305 = vmatmul.bf16.gmra.mxu0 %v1289
        %v1306 = vpop.f32.mrf.mxu0
        %v1307 = vadd.f32 0.0, %v1306
        %v1308 = vpop.f32.mrf.mxu0
        %1309 = vdwg.mxu0
        %1310 = vmatpush.bf16.msra.mxu0 0
        %1311 = vmatpush.bf16.msra.mxu0 0
        %1312 = vmatpush.bf16.msra.mxu0 0
        %1313 = vmatpush.bf16.msra.mxu0 0
        %1314 = vmatpush.bf16.msra.mxu0 0
        %1315 = vmatpush.bf16.msra.mxu0 0
        %1316 = vmatpush.bf16.msra.mxu0 0
        %1317 = vmatpush.bf16.msra.mxu0 %v1295
        %1318 = vmatmul.bf16.gmra.mxu0 %v1289
        %v1319 = vpop.f32.mrf.mxu0
        %v1320 = vadd.f32 0.0, %v1319
        %v1321 = vpop.f32.mrf.mxu0
        %1322 = vdwg.mxu0
        %v1323 = vadd.f32 %v1259, %v1307
        %v1324 = vadd.f32 %v1260, %v1320
        %1325 = vrot.lane.b32.xlu0 %v310, 32
        %v1326 = vpop.permute.xlu0 %1325
        %1327 = vrot.lane.b32.xlu0 %v311, 32
        %v1328 = vpop.permute.xlu0 %1327
        %v1329 = vsel %vm719, %v1326, %v1328
        %v1333 = vmul.f32 %v988, %v1326
        %v1334 = vmul.f32 %v989, %v1329
        %v1335 = vmul.f32 %v1085, %v1328
        %v1336 = vpack.c.bf16 %v1333, %v1333
        %v1337 = vpack.c.bf16 %v1334, %v1334
        %v1338 = vpack.c.bf16 %v1335, %v1335
        %s1339 = scalar_lea.vmem %s3, 24
        %v1340 = vld [vmem:[%s1339] sm:$0xf]
        %1344 = vrot.lane.b32.xlu0 %v1336, 96
        %v1345 = vpop.permute.xlu0 %1344
        %1346 = vrot.lane.b32.xlu0 %v1337, 96
        %v1347 = vpop.permute.xlu0 %1346
        %1348 = vrot.lane.b32.xlu0 %v1338, 96
        %v1349 = vpop.permute.xlu0 %1348
        %v1350 = vsel %vm750, %v1345, %v1347
        %v1351 = vsel %vm750, %v1347, %v1349
        %v1353 = vsel %vm1014, %v1340, 0
        %v1356 = vsel %vm315, %v1350, 0
        %v1359 = vsel %vm315, %v1351, 0
        %1361 = vmatpush.bf16.msra.mxu0 0
        %1362 = vmatpush.bf16.msra.mxu0 0
        %1363 = vmatpush.bf16.msra.mxu0 0
        %1364 = vmatpush.bf16.msra.mxu0 0
        %1365 = vmatpush.bf16.msra.mxu0 0
        %1366 = vmatpush.bf16.msra.mxu0 0
        %1367 = vmatpush.bf16.msra.mxu0 0
        %1368 = vmatpush.bf16.msra.mxu0 %v1356
        %1369 = vmatmul.bf16.gmra.mxu0 %v1353
        %v1370 = vpop.f32.mrf.mxu0
        %v1371 = vadd.f32 0.0, %v1370
        %v1372 = vpop.f32.mrf.mxu0
        %1373 = vdwg.mxu0
        %1374 = vmatpush.bf16.msra.mxu0 0
        %1375 = vmatpush.bf16.msra.mxu0 0
        %1376 = vmatpush.bf16.msra.mxu0 0
        %1377 = vmatpush.bf16.msra.mxu0 0
        %1378 = vmatpush.bf16.msra.mxu0 0
        %1379 = vmatpush.bf16.msra.mxu0 0
        %1380 = vmatpush.bf16.msra.mxu0 0
        %1381 = vmatpush.bf16.msra.mxu0 %v1359
        %1382 = vmatmul.bf16.gmra.mxu0 %v1353
        %v1383 = vpop.f32.mrf.mxu0
        %v1384 = vadd.f32 0.0, %v1383
        %v1385 = vpop.f32.mrf.mxu0
        %1386 = vdwg.mxu0
        %v1387 = vadd.f32 %v1323, %v1371
        %v1388 = vadd.f32 %v1324, %v1384
        %s1389 = scalar_lea.vmem %s3, 28
        %v1390 = vld [vmem:[%s1389] sm:$0xf]
        %1391 = vrot.lane.b32.xlu0 %v1003, 95
        %v1392 = vpop.permute.xlu0 %1391
        %1393 = vrot.lane.b32.xlu0 %v1004, 95
        %v1394 = vpop.permute.xlu0 %1393
        %1395 = vrot.lane.b32.xlu0 %v1005, 95
        %v1396 = vpop.permute.xlu0 %1395
        %v1397 = vsel %vm807, %v1392, %v1394
        %v1398 = vsel %vm807, %v1394, %v1396
        %v1400 = vsel %vm1014, %v1390, 0
        %v1403 = vsel %vm315, %v1397, 0
        %v1406 = vsel %vm315, %v1398, 0
        %1408 = vmatpush.bf16.msra.mxu0 0
        %1409 = vmatpush.bf16.msra.mxu0 0
        %1410 = vmatpush.bf16.msra.mxu0 0
        %1411 = vmatpush.bf16.msra.mxu0 0
        %1412 = vmatpush.bf16.msra.mxu0 0
        %1413 = vmatpush.bf16.msra.mxu0 0
        %1414 = vmatpush.bf16.msra.mxu0 0
        %1415 = vmatpush.bf16.msra.mxu0 %v1403
        %1416 = vmatmul.bf16.gmra.mxu0 %v1400
        %v1417 = vpop.f32.mrf.mxu0
        %v1418 = vadd.f32 0.0, %v1417
        %v1419 = vpop.f32.mrf.mxu0
        %1420 = vdwg.mxu0
        %1421 = vmatpush.bf16.msra.mxu0 0
        %1422 = vmatpush.bf16.msra.mxu0 0
        %1423 = vmatpush.bf16.msra.mxu0 0
        %1424 = vmatpush.bf16.msra.mxu0 0
        %1425 = vmatpush.bf16.msra.mxu0 0
        %1426 = vmatpush.bf16.msra.mxu0 0
        %1427 = vmatpush.bf16.msra.mxu0 0
        %1428 = vmatpush.bf16.msra.mxu0 %v1406
        %1429 = vmatmul.bf16.gmra.mxu0 %v1400
        %v1430 = vpop.f32.mrf.mxu0
        %v1431 = vadd.f32 0.0, %v1430
        %v1432 = vpop.f32.mrf.mxu0
        %1433 = vdwg.mxu0
        %v1434 = vadd.f32 %v1387, %v1418
        %v1435 = vadd.f32 %v1388, %v1431
        %1436 = vrot.lane.b32.xlu0 %v422, 34
        %v1437 = vpop.permute.xlu0 %1436
        %1438 = vrot.lane.b32.xlu0 %v423, 34
        %v1439 = vpop.permute.xlu0 %1438
        %v1440 = vsel %vm853, %v1437, %v1439
        %v1444 = vmul.f32 %v988, %v1437
        %v1445 = vmul.f32 %v989, %v1440
        %v1446 = vmul.f32 %v1085, %v1439
        %v1447 = vpack.c.bf16 %v1444, %v1444
        %v1448 = vpack.c.bf16 %v1445, %v1445
        %v1449 = vpack.c.bf16 %v1446, %v1446
        %s1450 = scalar_lea.vmem %s3, 32
        %v1451 = vld [vmem:[%s1450] sm:$0xf]
        %1455 = vrot.lane.b32.xlu0 %v1447, 94
        %v1456 = vpop.permute.xlu0 %1455
        %1457 = vrot.lane.b32.xlu0 %v1448, 94
        %v1458 = vpop.permute.xlu0 %1457
        %1459 = vrot.lane.b32.xlu0 %v1449, 94
        %v1460 = vpop.permute.xlu0 %1459
        %v1461 = vsel %vm884, %v1456, %v1458
        %v1462 = vsel %vm884, %v1458, %v1460
        %v1464 = vsel %vm1014, %v1451, 0
        %v1467 = vsel %vm315, %v1461, 0
        %v1470 = vsel %vm315, %v1462, 0
        %1472 = vmatpush.bf16.msra.mxu0 0
        %1473 = vmatpush.bf16.msra.mxu0 0
        %1474 = vmatpush.bf16.msra.mxu0 0
        %1475 = vmatpush.bf16.msra.mxu0 0
        %1476 = vmatpush.bf16.msra.mxu0 0
        %1477 = vmatpush.bf16.msra.mxu0 0
        %1478 = vmatpush.bf16.msra.mxu0 0
        %1479 = vmatpush.bf16.msra.mxu0 %v1467
        %1480 = vmatmul.bf16.gmra.mxu0 %v1464
        %v1481 = vpop.f32.mrf.mxu0
        %v1482 = vadd.f32 0.0, %v1481
        %v1483 = vpop.f32.mrf.mxu0
        %1484 = vdwg.mxu0
        %1485 = vmatpush.bf16.msra.mxu0 0
        %1486 = vmatpush.bf16.msra.mxu0 0
        %1487 = vmatpush.bf16.msra.mxu0 0
        %1488 = vmatpush.bf16.msra.mxu0 0
        %1489 = vmatpush.bf16.msra.mxu0 0
        %1490 = vmatpush.bf16.msra.mxu0 0
        %1491 = vmatpush.bf16.msra.mxu0 0
        %1492 = vmatpush.bf16.msra.mxu0 %v1470
        %1493 = vmatmul.bf16.gmra.mxu0 %v1464
        %v1494 = vpop.f32.mrf.mxu0
        %v1495 = vadd.f32 0.0, %v1494
        %v1496 = vpop.f32.mrf.mxu0
        %1497 = vdwg.mxu0
        %v1498 = vadd.f32 %v1434, %v1482
        %v1499 = vadd.f32 %v1435, %v1495
        %v1500 = vadd.f32 %v1498, %v1499
        %1501 = vadd.xlane.f32.xlu0 %v1500
        %v1502 = vpop.xlane.xlu0 %1501
        %v1503 = vmul.f32 %v1502, 0.00390625
        %v1504 = vmul.f32 %v1498, %v1498
        %v1505 = vmul.f32 %v1499, %v1499
        %v1506 = vadd.f32 %v1504, %v1505
        %1507 = vadd.xlane.f32.xlu0 %v1506
        %v1508 = vpop.xlane.xlu0 %1507
        %v1509 = vmul.f32 %v1508, 0.00390625
        %v1510 = vmul.f32 %v1503, %v1503
        %v1511 = vsub.f32 %v1509, %v1510
        %v1512 = vmax.f32 %v1511, 0.0
        %v1513 = vld [vmem:[%s4] sm:$0xff]
        %v1514 = vadd.f32 %v1512, 1e-05
        %v1515 = vrsqrt.pop %v1514
        %v1516 = vmul.f32 %v1515, %v1514
        %v1517 = vmul.f32 %v1516, %v1515
        %v1518 = vmul.f32 0.5, %v1517
        %v1519 = vsub.f32 1.5, %v1518
        %v1520 = vmul.f32 %v1515, %v1519
        %vm1521 = vweird.f32 %v1514
        %vm1522 = vweird.f32 %v1515
        %vm1523 = vmor %vm1521, %vm1522
        %v1524 = vsel %vm1523, %v1515, %v1520
        %v1525 = vmul.f32 %v1513, %v1524
        %v1526 = vmul.f32 %v1503, %v1525
        %1528 = vrot.lane.b32.xlu0 %v1526, 1
        %v1529 = vpop.permute.xlu0 %1528
        %v1531 = vsub.f32 %v1513, %v1529
        %1533 = vset.pattern.permute.xlu0 0
        %1534 = vperm.xlu0 %1533, %v1525
        %v1535 = vpop.permute.xlu0 %1534
        %v1537 = vmul.f32 %v1498, %v1535
        %v1538 = vmul.f32 %v1499, %v1535
        %1540 = vset.pattern.permute.xlu0 1
        %1541 = vperm.xlu0 %1540, %v1531
        %v1542 = vpop.permute.xlu0 %1541
        %v1544 = vadd.f32 %v1537, %v1542
        %v1545 = vadd.f32 %v1538, %v1542
        %v1546 = vmul.f32 %v1544, 0.01
        %v1547 = vmul.f32 %v1545, 0.01
        %v1548 = vmax.f32 %v1544, %v1546
        %v1549 = vmax.f32 %v1545, %v1547
        %1550 = vst [vmem:[%s217] sm:$0xff] %v1548
        %1551 = vst [vmem:[%s217 + $0x8] sm:$0xff] %v1549
        %s1552 = sand.u32 %s137, 1
        %s1553 = scalar_lea.sflag [#allocation5], %s1552
        %s1554 = sand.u32 %s137, 1
        %s1555 = smul.addr %s1554, 16
        %s1556 = scalar_lea.vmem [#allocation4], %s1555
        // Predicated region
        $region41: #{tpu_custom_call.1} parent=39 // pred_check
          %p1557 = pneg %p147
        $region42: #{tpu_custom_call.1} parent=39 // pred_check_branch
          %1559 = sbr.rel (%p1557) target = $region44
        $region43: #{tpu_custom_call.1} parent=39 // pred_region
          %1561 = vsyncadd %s1553, 0
          %s1562 = smul.addr %s19, 2
          %s1563 = smul.addr %s1562, 8
          %s1564 = scalar_lea.hbm %s5, %s1563
          %s1566 = sshll.u32 %s1556, 4
          %s1567 = int_to_ptr.vmem [resolvable:$true] %s1566
          %s1568 = sshll.u32 %s1564, 4
          %s1569 = int_to_ptr.hbm [resolvable:$true] %s1568
          %1571 = dma.vmem_to_hbm [thread:$0]  %s1567, 256, %s1569, %s1553
        $region44: #{tpu_custom_call.1} parent=39 // pred_fallthru
          _
      $region40: #{tpu_custom_call.1} parent=5 // pred_fallthru
        _
      %p1572 = scmp.le.s32.totalorder 2, %s14
      // Predicated region
      $region45: #{tpu_custom_call.1} parent=5 // pred_check
        %p1573 = pneg %p1572
      $region46: #{tpu_custom_call.1} parent=5 // pred_check_branch
        %1575 = sbr.rel (%p1573) target = $region48
      $region47: #{tpu_custom_call.1} parent=5 // pred_region
        %s1576 = ssub.s32 %s14, 2
        // Predicated region
        $region49: #{tpu_custom_call.1} parent=47 // pred_check
          %p1577 = pneg %p153
        $region50: #{tpu_custom_call.1} parent=47 // pred_check_branch
          %1579 = sbr.rel (%p1577) target = $region52
        $region51: #{tpu_custom_call.1} parent=47 // pred_region
          %s1580 = sand.u32 %s138, 1
          %s1581 = scalar_lea.sflag [#allocation5], %s1580
          %s1582 = sand.u32 %s138, 1
          %s1583 = smul.addr %s1582, 16
          %s1584 = scalar_lea.vmem [#allocation4], %s1583
          %1586 = dma.done %s1581, 256
        $region52: #{tpu_custom_call.1} parent=47 // pred_fallthru
          _
      $region48: #{tpu_custom_call.1} parent=5 // pred_fallthru
        _
    $region6: #{tpu_custom_call.1} parent=1 // loop_footer
      %s18 = sadd.s32 1, %s14
    $region7: #{tpu_custom_call.1} parent=1 // loop_footer_branch
      %13 = sbr.rel target = $region3
    $region8: #{tpu_custom_call.1} parent=1 // loop_exit
      _
    %1587 = vsyncpa [#allocation5], 1
    %s1588 = scalar_lea.sflag [#allocation5], 1
    %1589 = vsyncpa %s1588, 1

</llo_original>
